<compile_context>
chip_gen: v6e
topology: v6e:2x2x1
jax: 0.10.0
libtpu: 0.0.40
codegen_flags: <defaults>
</compile_context>

<pallas_src>
import jax
import jax.numpy as jnp
from jax.experimental import pallas as pl
from jax.experimental.pallas import tpu as pltpu

BATCH = 2
SEQ = 128
IN_FEATURES = 128
HIDDEN_FEATURES = 256
OUT_FEATURES = 128
TM = 128                      # token-tile rows per grid step

_SQRT_HALF = 0.7071067811865476


def _erf(z):
    # Abramowitz & Stegun 7.1.26 rational approximation (max abs err ~1.5e-7).
    # Uses only exp / mul / add / div / where, all of which lower cleanly in Mosaic.
    a1, a2, a3, a4, a5 = 0.254829592, -0.284496736, 1.421413741, -1.453152027, 1.061405429
    p = 0.3275911
    za = jnp.abs(z)
    t = 1.0 / (1.0 + p * za)
    poly = ((((a5 * t + a4) * t + a3) * t + a2) * t + a1) * t
    y = 1.0 - poly * jnp.exp(-za * za)
    return jnp.where(z >= 0, y, -y)


def _gelu_exact(x):
    # nn.GELU() default (approximate='none'): 0.5 * x * (1 + erf(x / sqrt(2)))
    return 0.5 * x * (1.0 + _erf(x * _SQRT_HALF))


def mlp_kernel(x_ref, w1_ref, b1_ref, w2_ref, b2_ref, o_ref):
    # x_ref:  (TM, IN)       f32
    # w1_ref: (IN, HIDDEN)   bf16 (pre-transposed to (in, out))
    # b1_ref: (1, HIDDEN)    f32
    # w2_ref: (HIDDEN, OUT)  bf16 (pre-transposed to (in, out))
    # b2_ref: (1, OUT)       f32
    # o_ref:  (TM, OUT)      f32
    x = x_ref[...]
    h = jnp.dot(x.astype(jnp.bfloat16), w1_ref[...],
                preferred_element_type=jnp.float32) + b1_ref[...]
    h = _gelu_exact(h)                                   # f32 elementwise (VPU/EUP)
    y = jnp.dot(h.astype(jnp.bfloat16), w2_ref[...],
                preferred_element_type=jnp.float32) + b2_ref[...]
    o_ref[...] = y


def mlp_forward(x, params):
    """x: (B, N, in_features) float32. Returns (B, N, out_features) float32."""
    b, n, c_in = x.shape
    m = b * n
    assert m % TM == 0, "token count must be a multiple of the 128-row tile"

    x2d = x.reshape(m, c_in)

    # PyTorch Linear stores weight as (out, in); pre-transpose to (in, out) and
    # pre-cast to bf16 for the MXU. Biases stay f32.
    w1 = params["w1"].T.astype(jnp.bfloat16)             # (in, hidden)
    b1 = params["b1"].reshape(1, -1).astype(jnp.float32)  # (1, hidden)
    w2 = params["w2"].T.astype(jnp.bfloat16)             # (hidden, out)
    b2 = params["b2"].reshape(1, -1).astype(jnp.float32)  # (1, out)

    hidden = w1.shape[1]
    c_out = w2.shape[1]

    out = pl.pallas_call(
        mlp_kernel,
        out_shape=jax.ShapeDtypeStruct((m, c_out), jnp.float32),
        grid=(m // TM,),
        in_specs=[
            pl.BlockSpec((TM, c_in), lambda i: (i, 0)),       # x tile
            pl.BlockSpec((c_in, hidden), lambda i: (0, 0)),    # W1^T
            pl.BlockSpec((1, hidden), lambda i: (0, 0)),       # b1
            pl.BlockSpec((hidden, c_out), lambda i: (0, 0)),   # W2^T
            pl.BlockSpec((1, c_out), lambda i: (0, 0)),        # b2
        ],
        out_specs=pl.BlockSpec((TM, c_out), lambda i: (i, 0)),
        compiler_params=pltpu.CompilerParams(
            dimension_semantics=("parallel",)),                # v7x: split tokens across TCs
    )(x2d, w1, b1, w2, b2)

    return out.reshape(b, n, c_out)


def reference(x, params, matmul_dtype=jnp.float32):
    """Pure-JAX reference of the PyTorch forward (dropout p=0.0 -> identity).

    matmul_dtype lets us build a precision-matched reference (bf16 operands,
    f32 accumulation) as well as the full-f32 one.
    """
    w1 = params["w1"].T.astype(matmul_dtype)
    w2 = params["w2"].T.astype(matmul_dtype)
    b1 = params["b1"].astype(jnp.float32)
    b2 = params["b2"].astype(jnp.float32)
    h = jnp.dot(x.astype(matmul_dtype), w1, preferred_element_type=jnp.float32) + b1
    h = 0.5 * h * (1.0 + jax.scipy.special.erf(h * _SQRT_HALF))   # exact GELU
    y = jnp.dot(h.astype(matmul_dtype), w2, preferred_element_type=jnp.float32) + b2
    return y


def init_params(key):
    k1, k2, k3, k4 = jax.random.split(key, 4)
    s1 = 1.0 / jnp.sqrt(jnp.float32(IN_FEATURES))
    s2 = 1.0 / jnp.sqrt(jnp.float32(HIDDEN_FEATURES))
    return {
        "w1": s1 * jax.random.normal(k1, (HIDDEN_FEATURES, IN_FEATURES), jnp.float32),
        "b1": 0.1 * jax.random.normal(k2, (HIDDEN_FEATURES,), jnp.float32),
        "w2": s2 * jax.random.normal(k3, (OUT_FEATURES, HIDDEN_FEATURES), jnp.float32),
        "b2": 0.1 * jax.random.normal(k4, (OUT_FEATURES,), jnp.float32),
    }


if __name__ == "__main__":
    key = jax.random.PRNGKey(0)
    kx, kp = jax.random.split(key, 2)
    x = jax.random.normal(kx, (BATCH, SEQ, IN_FEATURES), jnp.float32)
    params = init_params(kp)

    out = jax.block_until_ready(mlp_forward(x, params))
    assert out.shape == (BATCH, SEQ, OUT_FEATURES)

    # Precision-matched reference (bf16 MXU operands, f32 accumulation) -> tight check.
    ref_bf16 = jax.block_until_ready(reference(x, params, matmul_dtype=jnp.bfloat16))
    assert jnp.allclose(out, ref_bf16, rtol=1e-3, atol=1e-3), \
        float(jnp.max(jnp.abs(out - ref_bf16)))

    # Full-f32 reference (exact PyTorch-equivalent math); loose tolerance covers the
    # bf16 operand rounding of the MXU matmuls.
    ref_f32 = jax.block_until_ready(reference(x, params, matmul_dtype=jnp.float32))
    assert jnp.allclose(out, ref_f32, rtol=2e-2, atol=3e-2), \
        float(jnp.max(jnp.abs(out - ref_f32)))

    print("KERNEL_OK")
</pallas_src>

<mosaic_0001>
module attributes {stable_mosaic.version = 11 : i64} {
  func.func @mlp_kernel(%arg0: i32, %arg1: memref<128x128xf32, #tpu.memory_space<vmem>>, %arg2: memref<128x256xbf16, #tpu.memory_space<vmem>>, %arg3: memref<1x256xf32, #tpu.memory_space<vmem>>, %arg4: memref<256x128xbf16, #tpu.memory_space<vmem>>, %arg5: memref<1x128xf32, #tpu.memory_space<vmem>>, %arg6: memref<128x128xf32, #tpu.memory_space<vmem>>) attributes {dimension_semantics = [#tpu.dimension_semantics<parallel>], iteration_bounds = array<i64: 2>, scalar_prefetch = 0 : i64, scratch_operands = 0 : i64, tpu.core_type = #tpu.core_type<tc>, window_params = [{transform_indices = @transform_0, window_bounds = array<i64: 128, 128>}, {pipeline_mode = #tpu.pipeline_mode<synchronous>, transform_indices = @transform_1, window_bounds = array<i64: 128, 256>}, {pipeline_mode = #tpu.pipeline_mode<synchronous>, transform_indices = @transform_2, window_bounds = array<i64: 1, 256>}, {pipeline_mode = #tpu.pipeline_mode<synchronous>, transform_indices = @transform_3, window_bounds = array<i64: 256, 128>}, {pipeline_mode = #tpu.pipeline_mode<synchronous>, transform_indices = @transform_4, window_bounds = array<i64: 1, 128>}, {transform_indices = @transform_5, window_bounds = array<i64: 128, 128>}]} {
    %c0 = arith.constant 0 : index
    %c0_0 = arith.constant 0 : index
    %0 = vector.load %arg1[%c0, %c0_0] : memref<128x128xf32, #tpu.memory_space<vmem>>, vector<128x128xf32>
    %1 = arith.truncf %0 : vector<128x128xf32> to vector<128x128xbf16>
    %c0_1 = arith.constant 0 : index
    %c0_2 = arith.constant 0 : index
    %2 = vector.load %arg2[%c0_1, %c0_2] : memref<128x256xbf16, #tpu.memory_space<vmem>>, vector<128x256xbf16>
    %cst = arith.constant dense<0.000000e+00> : vector<128x256xf32>
    %3 = tpu.matmul %1, %2, %cst {dimension_numbers = #tpu.dot_dimension_numbers<[1], [0], [0], [1], [0, 0, 1, 1], [], []>} : vector<128x128xbf16>, vector<128x256xbf16>, vector<128x256xf32> -> vector<128x256xf32>
    %c0_3 = arith.constant 0 : index
    %c0_4 = arith.constant 0 : index
    %4 = vector.load %arg3[%c0_3, %c0_4] : memref<1x256xf32, #tpu.memory_space<vmem>>, vector<1x256xf32>
    %5 = vector.broadcast %4 : vector<1x256xf32> to vector<128x256xf32>
    %6 = arith.addf %3, %5 : vector<128x256xf32>
    %cst_5 = arith.constant 5.000000e-01 : f32
    %7 = vector.broadcast %cst_5 : f32 to vector<128x256xf32>
    %8 = arith.mulf %7, %6 : vector<128x256xf32>
    %cst_6 = arith.constant 0.707106769 : f32
    %9 = vector.broadcast %cst_6 : f32 to vector<128x256xf32>
    %10 = arith.mulf %6, %9 : vector<128x256xf32>
    %11 = math.absf %10 : vector<128x256xf32>
    %cst_7 = arith.constant 0.327591091 : f32
    %12 = vector.broadcast %cst_7 : f32 to vector<128x256xf32>
    %13 = arith.mulf %12, %11 : vector<128x256xf32>
    %cst_8 = arith.constant 1.000000e+00 : f32
    %14 = vector.broadcast %cst_8 : f32 to vector<128x256xf32>
    %15 = arith.addf %14, %13 : vector<128x256xf32>
    %cst_9 = arith.constant 1.000000e+00 : f32
    %16 = vector.broadcast %cst_9 : f32 to vector<128x256xf32>
    %17 = arith.divf %16, %15 : vector<128x256xf32>
    %cst_10 = arith.constant 1.06140542 : f32
    %18 = vector.broadcast %cst_10 : f32 to vector<128x256xf32>
    %19 = arith.mulf %18, %17 : vector<128x256xf32>
    %cst_11 = arith.constant -1.45315206 : f32
    %20 = vector.broadcast %cst_11 : f32 to vector<128x256xf32>
    %21 = arith.addf %19, %20 : vector<128x256xf32>
    %22 = arith.mulf %21, %17 : vector<128x256xf32>
    %cst_12 = arith.constant 1.42141378 : f32
    %23 = vector.broadcast %cst_12 : f32 to vector<128x256xf32>
    %24 = arith.addf %22, %23 : vector<128x256xf32>
    %25 = arith.mulf %24, %17 : vector<128x256xf32>
    %cst_13 = arith.constant -0.284496725 : f32
    %26 = vector.broadcast %cst_13 : f32 to vector<128x256xf32>
    %27 = arith.addf %25, %26 : vector<128x256xf32>
    %28 = arith.mulf %27, %17 : vector<128x256xf32>
    %cst_14 = arith.constant 0.254829586 : f32
    %29 = vector.broadcast %cst_14 : f32 to vector<128x256xf32>
    %30 = arith.addf %28, %29 : vector<128x256xf32>
    %31 = arith.mulf %30, %17 : vector<128x256xf32>
    %cst_15 = arith.constant 0.000000e+00 : f32
    %32 = vector.broadcast %cst_15 : f32 to vector<128x256xf32>
    %33 = arith.subf %32, %11 : vector<128x256xf32>
    %34 = arith.mulf %33, %11 : vector<128x256xf32>
    %35 = math.exp %34 : vector<128x256xf32>
    %36 = arith.mulf %31, %35 : vector<128x256xf32>
    %cst_16 = arith.constant 1.000000e+00 : f32
    %37 = vector.broadcast %cst_16 : f32 to vector<128x256xf32>
    %38 = arith.subf %37, %36 : vector<128x256xf32>
    %cst_17 = arith.constant 0.000000e+00 : f32
    %39 = vector.broadcast %cst_17 : f32 to vector<128x256xf32>
    %40 = arith.cmpf oge, %10, %39 : vector<128x256xf32>
    %cst_18 = arith.constant 0.000000e+00 : f32
    %41 = vector.broadcast %cst_18 : f32 to vector<128x256xf32>
    %42 = arith.subf %41, %38 : vector<128x256xf32>
    %43 = arith.select %40, %38, %42 : vector<128x256xi1>, vector<128x256xf32>
    %cst_19 = arith.constant 1.000000e+00 : f32
    %44 = vector.broadcast %cst_19 : f32 to vector<128x256xf32>
    %45 = arith.addf %44, %43 : vector<128x256xf32>
    %46 = arith.mulf %8, %45 : vector<128x256xf32>
    %47 = arith.truncf %46 : vector<128x256xf32> to vector<128x256xbf16>
    %c0_20 = arith.constant 0 : index
    %c0_21 = arith.constant 0 : index
    %48 = vector.load %arg4[%c0_20, %c0_21] : memref<256x128xbf16, #tpu.memory_space<vmem>>, vector<256x128xbf16>
    %cst_22 = arith.constant dense<0.000000e+00> : vector<128x128xf32>
    %49 = tpu.matmul %47, %48, %cst_22 {dimension_numbers = #tpu.dot_dimension_numbers<[1], [0], [0], [1], [0, 0, 1, 1], [], []>} : vector<128x256xbf16>, vector<256x128xbf16>, vector<128x128xf32> -> vector<128x128xf32>
    %c0_23 = arith.constant 0 : index
    %c0_24 = arith.constant 0 : index
    %50 = vector.load %arg5[%c0_23, %c0_24] : memref<1x128xf32, #tpu.memory_space<vmem>>, vector<1x128xf32>
    %51 = vector.broadcast %50 : vector<1x128xf32> to vector<128x128xf32>
    %52 = arith.addf %49, %51 : vector<128x128xf32>
    %c0_25 = arith.constant 0 : index
    %c0_26 = arith.constant 0 : index
    %53 = vector.load %arg6[%c0_25, %c0_26] : memref<128x128xf32, #tpu.memory_space<vmem>>, vector<128x128xf32>
    tpu.vector_store %arg6[%c0_25, %c0_26], %52 {strides = array<i32>} : memref<128x128xf32, #tpu.memory_space<vmem>>, vector<128x128xf32>,
    return
  }
  func.func @transform_0(%arg0: i32) -> (i32, i32) {
    %c0_i32 = arith.constant 0 : i32
    %c0_i32_0 = arith.constant 0 : i32
    return %arg0, %c0_i32 : i32, i32
  }
  func.func @transform_1(%arg0: i32) -> (i32, i32) {
    %c0_i32 = arith.constant 0 : i32
    %c0_i32_0 = arith.constant 0 : i32
    %c0_i32_1 = arith.constant 0 : i32
    return %c0_i32, %c0_i32_0 : i32, i32
  }
  func.func @transform_2(%arg0: i32) -> (i32, i32) {
    %c0_i32 = arith.constant 0 : i32
    %c0_i32_0 = arith.constant 0 : i32
    %c0_i32_1 = arith.constant 0 : i32
    return %c0_i32, %c0_i32_0 : i32, i32
  }
  func.func @transform_3(%arg0: i32) -> (i32, i32) {
    %c0_i32 = arith.constant 0 : i32
    %c0_i32_0 = arith.constant 0 : i32
    %c0_i32_1 = arith.constant 0 : i32
    return %c0_i32, %c0_i32_0 : i32, i32
  }
  func.func @transform_4(%arg0: i32) -> (i32, i32) {
    %c0_i32 = arith.constant 0 : i32
    %c0_i32_0 = arith.constant 0 : i32
    %c0_i32_1 = arith.constant 0 : i32
    return %c0_i32, %c0_i32_0 : i32, i32
  }
  func.func @transform_5(%arg0: i32) -> (i32, i32) {
    %c0_i32 = arith.constant 0 : i32
    %c0_i32_0 = arith.constant 0 : i32
    return %arg0, %c0_i32 : i32, i32
  }
}

</mosaic_0001>

<llo_original>
// kernel: tpu_custom_call.1
$region0: #{tpu_custom_call.1}
  #allocation0 [shape = 'u32[]', space=smem, size = 0x4, offset = 0x4, fixed_abs, tag = 'smem constant byte address 0x4 - core index']
  #allocation1 [shape = 'u32[144,128]{1,0:T(1,128)}', space=vmem, size = 0x12000, scoped, tag = 'internal scratch']
  %s0 = inlined_call_operand.hbm [shape: f32[256,128], index: 0, kind: input, shape index: {}]
  %s1 = inlined_call_operand.hbm [shape: bf16[128,256], index: 1, kind: input, shape index: {}]
  %s2 = inlined_call_operand.vmem [shape: f32[1,256], index: 2, kind: input, shape index: {}]
  %s3 = inlined_call_operand.hbm [shape: bf16[256,128], index: 3, kind: input, shape index: {}]
  %s4 = inlined_call_operand.vmem [shape: f32[1,128], index: 4, kind: input, shape index: {}]
  %s5 = inlined_call_operand.hbm [shape: f32[256,128], index: 5, kind: output, shape index: {}]
  %s6 = sld [smem:[#allocation0]]
  $region65: #{tpu_custom_call.1} parent=0
    _
  %s8 = ssub.s32 1, %s6
  %s9 = scalar_select 0, %s8, %s6
  $region1: #{tpu_custom_call.1} parent=0
    #allocation2 [shape = 'u8[131072]{0}', space=vmem, size = 0x20000, scoped, tag = 'input window, operand 0']
    #allocation3 [shape = 's32[2]{0}', space=sflag, size = 0x8, scoped, tag = 'scoped memory for tpu_custom_call.1']
    #allocation4 [shape = 's32[2]{0}', space=sflag, size = 0x8, scoped, tag = 'scoped memory for tpu_custom_call.1']
    #allocation5 [shape = 'u8[65536]{0}', space=vmem, size = 0x10000, scoped, tag = 'input window, operand 1, single buffered']
    #allocation6 [shape = 's32[1]{0}', space=sflag, size = 0x4, scoped, tag = 'scoped memory for tpu_custom_call.1']
    #allocation7 [shape = 'u8[65536]{0}', space=vmem, size = 0x10000, scoped, tag = 'input window, operand 3, single buffered']
    #allocation8 [shape = 'u8[131072]{0}', space=vmem, size = 0x20000, scoped, tag = 'output window, operand 0']
    %10 = vsyncpa [#allocation3], 0
    %s11 = scalar_lea.sflag [#allocation3], 1
    %12 = vsyncpa %s11, 0
    %13 = vsyncpa [#allocation6], 0
    %14 = vsyncpa [#allocation4], 0
    %s15 = scalar_lea.sflag [#allocation4], 1
    %16 = vsyncpa %s15, 0
    loop: start=0, step=1, limit=4
    $region2: #{tpu_custom_call.1} parent=1 // loop_pre_header
      _
    $region3: #{tpu_custom_call.1} parent=1 // loop_header
      %s18 = sphi 0, %s22
      %p19 = scmp.ge.s32.totalorder %s18, 4
      %s28 = sphi 0, %s30
      %s31 = sphi 0, %s28
      %s32 = sphi 0, %s31
      %s48 = sphi 0, %s32
      %s52 = sphi 0, %s52
      %s54 = sphi 0, %s52
      %s55 = sphi 0, %s54
      %s69 = sphi 0, %s55
      %s73 = sphi 0, %s73
      %s75 = sphi 0, %s73
      %s76 = sphi 0, %s75
      %s90 = sphi 0, %s76
      %s94 = sphi 0, %s94
      %s96 = sphi 0, %s94
      %s97 = sphi 0, %s96
      %s111 = sphi 0, %s97
      %s115 = sphi 0, %s115
      %s117 = sphi 0, %s115
      %s118 = sphi 0, %s117
      %s132 = sphi 0, %s118
      %s138 = sphi 0, %s140
      %s141 = sphi 0, %s138
      %s142 = sphi 0, %s141
      %s158 = sphi 0, %s142
    $region4: #{tpu_custom_call.1} parent=1 // loop_header_branch
      %21 = sbr.rel (%p19) target = $region8
    $region5: #{tpu_custom_call.1} parent=1 // loop_body
      %s23 = ssub.s32 %s18, 1
      %s24 = ssub.s32 %s18, 2
      %s25 = sadd.s32 %s18, 1
      %s26 = ssub.s32 %s18, %s25
      %p27 = scmp.eq.s32.totalorder %s26, 0
      %s29 = sadd.s32 %s28, 1
      %s30 = scalar_select %p27, %s28, %s29
      %p33 = pneg %p27
      %p34 = scmp.eq.s32.totalorder %s18, 1
      %p35 = por %p33, %p34
      %p36 = scmp.ne.s32.totalorder %s28, %s31
      %p37 = scmp.eq.s32.totalorder %s18, 0
      %p38 = por %p36, %p37
      %p39 = scmp.ne.s32.totalorder %s28, %s31
      %p40 = scmp.eq.s32.totalorder %s23, 1
      %p41 = por %p39, %p40
      %p42 = scmp.ne.s32.totalorder %s31, %s32
      %p43 = scmp.eq.s32.totalorder %s23, 0
      %p44 = por %p42, %p43
      %p45 = scmp.ne.s32.totalorder %s31, %s32
      %p46 = scmp.eq.s32.totalorder %s24, 1
      %p47 = por %p45, %p46
      %p49 = scmp.ne.s32.totalorder %s32, %s48
      %p50 = scmp.eq.s32.totalorder %s24, 0
      %p51 = por %p49, %p50
      %s53 = sadd.s32 %s52, 1
      %p56 = scmp.eq.s32.totalorder %s18, 1
      %p57 = scmp.ne.s32.totalorder %s52, %s54
      %p58 = scmp.eq.s32.totalorder %s18, 0
      %p59 = por %p57, %p58
      %p60 = scmp.ne.s32.totalorder %s52, %s54
      %p61 = scmp.eq.s32.totalorder %s23, 1
      %p62 = por %p60, %p61
      %p63 = scmp.ne.s32.totalorder %s54, %s55
      %p64 = scmp.eq.s32.totalorder %s23, 0
      %p65 = por %p63, %p64
      %p66 = scmp.ne.s32.totalorder %s54, %s55
      %p67 = scmp.eq.s32.totalorder %s24, 1
      %p68 = por %p66, %p67
      %p70 = scmp.ne.s32.totalorder %s55, %s69
      %p71 = scmp.eq.s32.totalorder %s24, 0
      %p72 = por %p70, %p71
      %s74 = sadd.s32 %s73, 1
      %p77 = scmp.eq.s32.totalorder %s18, 1
      %p78 = scmp.ne.s32.totalorder %s73, %s75
      %p79 = scmp.eq.s32.totalorder %s18, 0
      %p80 = por %p78, %p79
      %p81 = scmp.ne.s32.totalorder %s73, %s75
      %p82 = scmp.eq.s32.totalorder %s23, 1
      %p83 = por %p81, %p82
      %p84 = scmp.ne.s32.totalorder %s75, %s76
      %p85 = scmp.eq.s32.totalorder %s23, 0
      %p86 = por %p84, %p85
      %p87 = scmp.ne.s32.totalorder %s75, %s76
      %p88 = scmp.eq.s32.totalorder %s24, 1
      %p89 = por %p87, %p88
      %p91 = scmp.ne.s32.totalorder %s76, %s90
      %p92 = scmp.eq.s32.totalorder %s24, 0
      %p93 = por %p91, %p92
      %s95 = sadd.s32 %s94, 1
      %p98 = scmp.eq.s32.totalorder %s18, 1
      %p99 = scmp.ne.s32.totalorder %s94, %s96
      %p100 = scmp.eq.s32.totalorder %s18, 0
      %p101 = por %p99, %p100
      %p102 = scmp.ne.s32.totalorder %s94, %s96
      %p103 = scmp.eq.s32.totalorder %s23, 1
      %p104 = por %p102, %p103
      %p105 = scmp.ne.s32.totalorder %s96, %s97
      %p106 = scmp.eq.s32.totalorder %s23, 0
      %p107 = por %p105, %p106
      %p108 = scmp.ne.s32.totalorder %s96, %s97
      %p109 = scmp.eq.s32.totalorder %s24, 1
      %p110 = por %p108, %p109
      %p112 = scmp.ne.s32.totalorder %s97, %s111
      %p113 = scmp.eq.s32.totalorder %s24, 0
      %p114 = por %p112, %p113
      %s116 = sadd.s32 %s115, 1
      %p119 = scmp.eq.s32.totalorder %s18, 1
      %p120 = scmp.ne.s32.totalorder %s115, %s117
      %p121 = scmp.eq.s32.totalorder %s18, 0
      %p122 = por %p120, %p121
      %p123 = scmp.ne.s32.totalorder %s115, %s117
      %p124 = scmp.eq.s32.totalorder %s23, 1
      %p125 = por %p123, %p124
      %p126 = scmp.ne.s32.totalorder %s117, %s118
      %p127 = scmp.eq.s32.totalorder %s23, 0
      %p128 = por %p126, %p127
      %p129 = scmp.ne.s32.totalorder %s117, %s118
      %p130 = scmp.eq.s32.totalorder %s24, 1
      %p131 = por %p129, %p130
      %p133 = scmp.ne.s32.totalorder %s118, %s132
      %p134 = scmp.eq.s32.totalorder %s24, 0
      %p135 = por %p133, %p134
      %s136 = ssub.s32 %s18, %s25
      %p137 = scmp.eq.s32.totalorder %s136, 0
      %s139 = sadd.s32 %s138, 1
      %s140 = scalar_select %p137, %s138, %s139
      %p143 = pneg %p137
      %p144 = scmp.eq.s32.totalorder %s18, 1
      %p145 = por %p143, %p144
      %p146 = scmp.ne.s32.totalorder %s138, %s141
      %p147 = scmp.eq.s32.totalorder %s18, 0
      %p148 = por %p146, %p147
      %p149 = scmp.ne.s32.totalorder %s138, %s141
      %p150 = scmp.eq.s32.totalorder %s23, 1
      %p151 = por %p149, %p150
      %p152 = scmp.ne.s32.totalorder %s141, %s142
      %p153 = scmp.eq.s32.totalorder %s23, 0
      %p154 = por %p152, %p153
      %p155 = scmp.ne.s32.totalorder %s141, %s142
      %p156 = scmp.eq.s32.totalorder %s24, 1
      %p157 = por %p155, %p156
      %p159 = scmp.ne.s32.totalorder %s142, %s158
      %p160 = scmp.eq.s32.totalorder %s24, 0
      %p161 = por %p159, %p160
      %p162 = scmp.le.s32.totalorder 1, %s18
      %p163 = scmp.lt.s32.totalorder %s18, 3
      %p164 = pnand %p162, %p163
      %p165 = pneg %p164
      // Predicated region
      $region9: #{tpu_custom_call.1} parent=5 // pred_check
        _
      $region10: #{tpu_custom_call.1} parent=5 // pred_check_branch
        %167 = sbr.rel (%p164) target = $region12
      $region11: #{tpu_custom_call.1} parent=5 // pred_region
        %s168 = ssub.s32 %s18, 1
        // Predicated region
        $region13: #{tpu_custom_call.1} parent=11 // pred_check
          %p169 = pneg %p65
        $region14: #{tpu_custom_call.1} parent=11 // pred_check_branch
          %171 = sbr.rel (%p169) target = $region16
        $region15: #{tpu_custom_call.1} parent=11 // pred_region
          %s173 = ssub.s32 2048, 2048
          %174 = vsyncadd [#allocation6], %s173
          %s175 = sshll.u32 [#allocation5], 4
          %s176 = int_to_ptr.vmem [resolvable:$true] %s175
          %181 = dma.hbm_to_vmem [thread:$0]  %s1, 2048, %s176, [#allocation6], 128, 128, 8
        $region16: #{tpu_custom_call.1} parent=11 // pred_fallthru
          _
        // Predicated region
        $region17: #{tpu_custom_call.1} parent=11 // pred_check
          %p182 = pneg %p86
        $region18: #{tpu_custom_call.1} parent=11 // pred_check_branch
          %184 = sbr.rel (%p182) target = $region20
        $region19: #{tpu_custom_call.1} parent=11 // pred_region
          _
        $region20: #{tpu_custom_call.1} parent=11 // pred_fallthru
          _
        // Predicated region
        $region21: #{tpu_custom_call.1} parent=11 // pred_check
          %p185 = pneg %p107
        $region22: #{tpu_custom_call.1} parent=11 // pred_check_branch
          %187 = sbr.rel (%p185) target = $region24
        $region23: #{tpu_custom_call.1} parent=11 // pred_region
          %s189 = ssub.s32 2048, 2048
          %190 = vsyncadd [#allocation6], %s189
          %s191 = sshll.u32 [#allocation7], 4
          %s192 = int_to_ptr.vmem [resolvable:$true] %s191
          %197 = dma.hbm_to_vmem [thread:$0]  %s3, 2048, %s192, [#allocation6], 64, 64, 4
        $region24: #{tpu_custom_call.1} parent=11 // pred_fallthru
          _
        // Predicated region
        $region25: #{tpu_custom_call.1} parent=11 // pred_check
          %p198 = pneg %p128
        $region26: #{tpu_custom_call.1} parent=11 // pred_check_branch
          %200 = sbr.rel (%p198) target = $region28
        $region27: #{tpu_custom_call.1} parent=11 // pred_region
          _
        $region28: #{tpu_custom_call.1} parent=11 // pred_fallthru
          _
      $region12: #{tpu_custom_call.1} parent=5 // pred_fallthru
        _
      %p201 = scmp.lt.s32.totalorder %s18, 2
      // Predicated region
      $region29: #{tpu_custom_call.1} parent=5 // pred_check
        %p202 = pneg %p201
      $region30: #{tpu_custom_call.1} parent=5 // pred_check_branch
        %204 = sbr.rel (%p202) target = $region32
      $region31: #{tpu_custom_call.1} parent=5 // pred_region
        // Predicated region
        $region33: #{tpu_custom_call.1} parent=31 // pred_check
          %p205 = pneg %p38
        $region34: #{tpu_custom_call.1} parent=31 // pred_check_branch
          %207 = sbr.rel (%p205) target = $region36
        $region35: #{tpu_custom_call.1} parent=31 // pred_region
          %s208 = sand.u32 %s28, 1
          %s209 = scalar_lea.sflag [#allocation3], %s208
          %s210 = sand.u32 %s28, 1
          %s211 = smul.addr %s210, 128
          %s212 = scalar_lea.vmem [#allocation2], %s211
          %s213 = smul.u32 16, %s18
          %s215 = ssub.s32 2048, 2048
          %216 = vsyncadd %s209, %s215
          %s217 = smul.addr %s213, 128
          %s218 = scalar_lea.hbm %s0, %s217
          %s219 = sshll.u32 %s212, 4
          %s220 = int_to_ptr.vmem [resolvable:$true] %s219
          %225 = dma.hbm_to_vmem [thread:$0]  %s218, 2048, %s220, %s209, 128, 128, 8
        $region36: #{tpu_custom_call.1} parent=31 // pred_fallthru
          _
      $region32: #{tpu_custom_call.1} parent=5 // pred_fallthru
        _
      %p226 = scmp.le.s32.totalorder 1, %s18
      %p227 = scmp.lt.s32.totalorder %s18, 3
      %p228 = pnand %p226, %p227
      %p229 = pneg %p228
      // Predicated region
      $region37: #{tpu_custom_call.1} parent=5 // pred_check
        _
      $region38: #{tpu_custom_call.1} parent=5 // pred_check_branch
        %231 = sbr.rel (%p228) target = $region40
      $region39: #{tpu_custom_call.1} parent=5 // pred_region
        %s232 = ssub.s32 %s18, 1
        %s233 = sand.u32 %s31, 1
        %s234 = scalar_lea.sflag [#allocation3], %s233
        %s235 = sand.u32 %s31, 1
        %s236 = smul.addr %s235, 128
        %s237 = scalar_lea.vmem [#allocation2], %s236
        // Predicated region
        $region41: #{tpu_custom_call.1} parent=39 // pred_check
          %p238 = pneg %p44
        $region42: #{tpu_custom_call.1} parent=39 // pred_check_branch
          %240 = sbr.rel (%p238) target = $region44
        $region43: #{tpu_custom_call.1} parent=39 // pred_region
          %241 = dma.done %s234, 2048
        $region44: #{tpu_custom_call.1} parent=39 // pred_fallthru
          _
        // Predicated region
        $region45: #{tpu_custom_call.1} parent=39 // pred_check
          %p242 = pneg %p65
        $region46: #{tpu_custom_call.1} parent=39 // pred_check_branch
          %244 = sbr.rel (%p242) target = $region48
        $region47: #{tpu_custom_call.1} parent=39 // pred_region
          %245 = dma.done [#allocation6], 2048
        $region48: #{tpu_custom_call.1} parent=39 // pred_fallthru
          _
        // Predicated region
        $region49: #{tpu_custom_call.1} parent=39 // pred_check
          %p246 = pneg %p107
        $region50: #{tpu_custom_call.1} parent=39 // pred_check_branch
          %248 = sbr.rel (%p246) target = $region52
        $region51: #{tpu_custom_call.1} parent=39 // pred_region
          %249 = dma.done [#allocation6], 2048
        $region52: #{tpu_custom_call.1} parent=39 // pred_fallthru
          _
        %s250 = sand.u32 %s31, 1
        %s251 = scalar_lea.sflag [#allocation3], %s250
        %s252 = sand.u32 %s31, 1
        %s253 = smul.addr %s252, 128
        %s254 = scalar_lea.vmem [#allocation2], %s253
        %p255 = pneg %p44
        %p256 = pneg %p41
        %p257 = pneg %p65
        %p258 = pneg %p62
        %p259 = pneg %p86
        %p260 = pneg %p83
        %p261 = pneg %p107
        %p262 = pneg %p104
        %p263 = pneg %p128
        %p264 = pneg %p125
        %p265 = pneg %p154
        %p266 = pneg %p151
        %s267 = sand.u32 %s141, 1
        %s268 = scalar_lea.sflag [#allocation4], %s267
        %s269 = sand.u32 %s141, 1
        %s270 = smul.addr %s269, 128
        %s271 = scalar_lea.vmem [#allocation8], %s270
        %s272 = smul.u32 16, %s23
        %s273 = smul.u32 16, %s23
        %v275 = vld [vmem:[%s237] sm:$0xff]
        %v276 = vld [vmem:[%s237 + $0x8] sm:$0xff]
        %v277 = vld [vmem:[%s237 + $0x10] sm:$0xff]
        %v278 = vld [vmem:[%s237 + $0x18] sm:$0xff]
        %v279 = vld [vmem:[%s237 + $0x20] sm:$0xff]
        %v280 = vld [vmem:[%s237 + $0x28] sm:$0xff]
        %v281 = vld [vmem:[%s237 + $0x30] sm:$0xff]
        %v282 = vld [vmem:[%s237 + $0x38] sm:$0xff]
        %v283 = vld [vmem:[%s237 + $0x40] sm:$0xff]
        %v284 = vld [vmem:[%s237 + $0x48] sm:$0xff]
        %v285 = vld [vmem:[%s237 + $0x50] sm:$0xff]
        %v286 = vld [vmem:[%s237 + $0x58] sm:$0xff]
        %v287 = vld [vmem:[%s237 + $0x60] sm:$0xff]
        %v288 = vld [vmem:[%s237 + $0x68] sm:$0xff]
        %v289 = vld [vmem:[%s237 + $0x70] sm:$0xff]
        %v290 = vld [vmem:[%s237 + $0x78] sm:$0xff]
        %v291 = vpack.c.bf16 %v276, %v275
        %v292 = vpack.c.bf16 %v278, %v277
        %v293 = vpack.c.bf16 %v280, %v279
        %v294 = vpack.c.bf16 %v282, %v281
        %v295 = vpack.c.bf16 %v284, %v283
        %v296 = vpack.c.bf16 %v286, %v285
        %v297 = vpack.c.bf16 %v288, %v287
        %v298 = vpack.c.bf16 %v290, %v289
        %v299 = vld [vmem:[#allocation5] sm:$0xff]
        %v300 = vld [vmem:[#allocation5 + $0x8] sm:$0xff]
        %v301 = vld [vmem:[#allocation5 + $0x10] sm:$0xff]
        %v302 = vld [vmem:[#allocation5 + $0x18] sm:$0xff]
        %v303 = vld [vmem:[#allocation5 + $0x20] sm:$0xff]
        %v304 = vld [vmem:[#allocation5 + $0x28] sm:$0xff]
        %v305 = vld [vmem:[#allocation5 + $0x30] sm:$0xff]
        %v306 = vld [vmem:[#allocation5 + $0x38] sm:$0xff]
        %v307 = vld [vmem:[#allocation5 + $0x40] sm:$0xff]
        %v308 = vld [vmem:[#allocation5 + $0x48] sm:$0xff]
        %v309 = vld [vmem:[#allocation5 + $0x50] sm:$0xff]
        %v310 = vld [vmem:[#allocation5 + $0x58] sm:$0xff]
        %v311 = vld [vmem:[#allocation5 + $0x60] sm:$0xff]
        %v312 = vld [vmem:[#allocation5 + $0x68] sm:$0xff]
        %v313 = vld [vmem:[#allocation5 + $0x70] sm:$0xff]
        %v314 = vld [vmem:[#allocation5 + $0x78] sm:$0xff]
        %v315 = vld [vmem:[%s2] sm:$0x3]
        %v317 = vlaneseq
        %v318 = vshrl.u32 %v317, 7
        %v319 = vsub.s32 0, %v318
        %v320 = vrot.slane %v315, %v319
        %v321 = vlaneseq
        %v322 = vshrl.u32 %v321, 7
        %v323 = vsub.s32 1, %v322
        %v324 = vrot.slane %v315, %v323
        %v343 = vunpack.c.l.b16 %v299
        %v344 = vunpack.c.h.b16 %v299
        %v345 = vunpack.c.l.b16 %v300
        %v346 = vunpack.c.h.b16 %v300
        %v347 = vunpack.c.l.b16 %v301
        %v348 = vunpack.c.h.b16 %v301
        %v349 = vunpack.c.l.b16 %v302
        %v350 = vunpack.c.h.b16 %v302
        %v351 = vunpack.c.l.b16 %v303
        %v352 = vunpack.c.h.b16 %v303
        %v353 = vunpack.c.l.b16 %v304
        %v354 = vunpack.c.h.b16 %v304
        %v355 = vunpack.c.l.b16 %v305
        %v356 = vunpack.c.h.b16 %v305
        %v357 = vunpack.c.l.b16 %v306
        %v358 = vunpack.c.h.b16 %v306
        %v359 = vunpack.c.l.b16 %v307
        %v360 = vunpack.c.h.b16 %v307
        %v361 = vunpack.c.l.b16 %v308
        %v362 = vunpack.c.h.b16 %v308
        %v363 = vunpack.c.l.b16 %v309
        %v364 = vunpack.c.h.b16 %v309
        %v365 = vunpack.c.l.b16 %v310
        %v366 = vunpack.c.h.b16 %v310
        %v367 = vunpack.c.l.b16 %v311
        %v368 = vunpack.c.h.b16 %v311
        %v369 = vunpack.c.l.b16 %v312
        %v370 = vunpack.c.h.b16 %v312
        %v371 = vunpack.c.l.b16 %v313
        %v372 = vunpack.c.h.b16 %v313
        %v373 = vunpack.c.l.b16 %v314
        %v374 = vunpack.c.h.b16 %v314
        %v375 = vpack.c.b16 %v345, %v343
        %v376 = vpack.c.b16 %v346, %v344
        %v377 = vpack.c.b16 %v349, %v347
        %v378 = vpack.c.b16 %v350, %v348
        %v379 = vpack.c.b16 %v353, %v351
        %v380 = vpack.c.b16 %v354, %v352
        %v381 = vpack.c.b16 %v357, %v355
        %v382 = vpack.c.b16 %v358, %v356
        %v383 = vpack.c.b16 %v361, %v359
        %v384 = vpack.c.b16 %v362, %v360
        %v385 = vpack.c.b16 %v365, %v363
        %v386 = vpack.c.b16 %v366, %v364
        %v387 = vpack.c.b16 %v369, %v367
        %v388 = vpack.c.b16 %v370, %v368
        %v389 = vpack.c.b16 %v373, %v371
        %v390 = vpack.c.b16 %v374, %v372
        %407 = vmatprep.subr.bf16.mxu0 %v390
        %408 = vmatpush1.bf16.msra.mxu0 %v389
        %409 = vmatprep.subr.bf16.mxu0 %v388
        %410 = vmatpush1.bf16.msra.mxu0 %v387
        %411 = vmatprep.subr.bf16.mxu0 %v386
        %412 = vmatpush1.bf16.msra.mxu0 %v385
        %413 = vmatprep.subr.bf16.mxu0 %v384
        %414 = vmatpush1.bf16.msra.mxu0 %v383
        %415 = vmatprep.subr.bf16.mxu0 %v382
        %416 = vmatpush1.bf16.msra.mxu0 %v381
        %417 = vmatprep.subr.bf16.mxu0 %v380
        %418 = vmatpush1.bf16.msra.mxu0 %v379
        %419 = vmatprep.subr.bf16.mxu0 %v378
        %420 = vmatpush1.bf16.msra.mxu0 %v377
        %421 = vmatprep.subr.bf16.mxu0 %v376
        %422 = vmatpush1.bf16.msra.mxu0 %v375
        %423 = vmatprep.subr.bf16.mxu0 0
        %424 = vmatpush2.bf16.msra.mxu0 0
        %425 = vmatprep.subr.bf16.mxu0 0
        %426 = vmatpush2.bf16.msra.mxu0 0
        %427 = vmatprep.subr.bf16.mxu0 0
        %428 = vmatpush2.bf16.msra.mxu0 0
        %429 = vmatprep.subr.bf16.mxu0 0
        %430 = vmatpush2.bf16.msra.mxu0 0
        %431 = vmatprep.subr.bf16.mxu0 0
        %432 = vmatpush2.bf16.msra.mxu0 0
        %433 = vmatprep.subr.bf16.mxu0 0
        %434 = vmatpush2.bf16.msra.mxu0 0
        %435 = vmatprep.subr.bf16.mxu0 0
        %436 = vmatpush2.bf16.msra.mxu0 0
        %437 = vmatprep.subr.bf16.mxu0 0
        %438 = vmatpush2.bf16.msra.mxu0 0
        %439 = vmatprep.mubr.bf16.mxu0 0
        %440 = vmatmul.mubr.bf16.gmra.mxu0 %v291
        %v441 = vpop.f32.mrf.mxu0
        %v442 = vadd.f32 %v320, %v441
        %v443 = vpop.f32.mrf.mxu0
        %v444 = vadd.f32 %v324, %v443
        %v445 = vpop.f32.mrf.mxu0
        %v446 = vadd.f32 %v320, %v445
        %v447 = vpop.f32.mrf.mxu0
        %v448 = vadd.f32 %v324, %v447
        %449 = vmatprep.mubr.bf16.mxu0 0
        %450 = vmatmul.mubr.bf16.gmra.mxu0 %v292
        %v451 = vpop.f32.mrf.mxu0
        %v452 = vadd.f32 %v320, %v451
        %v453 = vpop.f32.mrf.mxu0
        %v454 = vadd.f32 %v324, %v453
        %v455 = vpop.f32.mrf.mxu0
        %v456 = vadd.f32 %v320, %v455
        %v457 = vpop.f32.mrf.mxu0
        %v458 = vadd.f32 %v324, %v457
        %459 = vmatprep.mubr.bf16.mxu0 0
        %460 = vmatmul.mubr.bf16.gmra.mxu0 %v293
        %v461 = vpop.f32.mrf.mxu0
        %v462 = vadd.f32 %v320, %v461
        %v463 = vpop.f32.mrf.mxu0
        %v464 = vadd.f32 %v324, %v463
        %v465 = vpop.f32.mrf.mxu0
        %v466 = vadd.f32 %v320, %v465
        %v467 = vpop.f32.mrf.mxu0
        %v468 = vadd.f32 %v324, %v467
        %469 = vmatprep.mubr.bf16.mxu0 0
        %470 = vmatmul.mubr.bf16.gmra.mxu0 %v294
        %v471 = vpop.f32.mrf.mxu0
        %v472 = vadd.f32 %v320, %v471
        %v473 = vpop.f32.mrf.mxu0
        %v474 = vadd.f32 %v324, %v473
        %v475 = vpop.f32.mrf.mxu0
        %v476 = vadd.f32 %v320, %v475
        %v477 = vpop.f32.mrf.mxu0
        %v478 = vadd.f32 %v324, %v477
        %479 = vmatprep.mubr.bf16.mxu0 0
        %480 = vmatmul.mubr.bf16.gmra.mxu0 %v295
        %v481 = vpop.f32.mrf.mxu0
        %v482 = vadd.f32 %v320, %v481
        %v483 = vpop.f32.mrf.mxu0
        %v484 = vadd.f32 %v324, %v483
        %v485 = vpop.f32.mrf.mxu0
        %v486 = vadd.f32 %v320, %v485
        %v487 = vpop.f32.mrf.mxu0
        %v488 = vadd.f32 %v324, %v487
        %489 = vmatprep.mubr.bf16.mxu0 0
        %490 = vmatmul.mubr.bf16.gmra.mxu0 %v296
        %v491 = vpop.f32.mrf.mxu0
        %v492 = vadd.f32 %v320, %v491
        %v493 = vpop.f32.mrf.mxu0
        %v494 = vadd.f32 %v324, %v493
        %v495 = vpop.f32.mrf.mxu0
        %v496 = vadd.f32 %v320, %v495
        %v497 = vpop.f32.mrf.mxu0
        %v498 = vadd.f32 %v324, %v497
        %499 = vmatprep.mubr.bf16.mxu0 0
        %500 = vmatmul.mubr.bf16.gmra.mxu0 %v297
        %v501 = vpop.f32.mrf.mxu0
        %v502 = vadd.f32 %v320, %v501
        %v503 = vpop.f32.mrf.mxu0
        %v504 = vadd.f32 %v324, %v503
        %v505 = vpop.f32.mrf.mxu0
        %v506 = vadd.f32 %v320, %v505
        %v507 = vpop.f32.mrf.mxu0
        %v508 = vadd.f32 %v324, %v507
        %509 = vmatprep.mubr.bf16.mxu0 0
        %510 = vmatmul.mubr.bf16.gmra.mxu0 %v298
        %v511 = vpop.f32.mrf.mxu0
        %v512 = vadd.f32 %v320, %v511
        %v513 = vpop.f32.mrf.mxu0
        %v514 = vadd.f32 %v324, %v513
        %v515 = vpop.f32.mrf.mxu0
        %v516 = vadd.f32 %v320, %v515
        %v517 = vpop.f32.mrf.mxu0
        %v518 = vadd.f32 %v324, %v517
        %519 = vdwg.mxu0
        %v520 = vmul.f32 %v442, 0.5
        %v521 = vmul.f32 %v444, 0.5
        %v522 = vmul.f32 %v446, 0.5
        %v523 = vmul.f32 %v448, 0.5
        %v524 = vmul.f32 %v452, 0.5
        %v525 = vmul.f32 %v454, 0.5
        %v526 = vmul.f32 %v456, 0.5
        %v527 = vmul.f32 %v458, 0.5
        %v528 = vmul.f32 %v462, 0.5
        %v529 = vmul.f32 %v464, 0.5
        %v530 = vmul.f32 %v466, 0.5
        %v531 = vmul.f32 %v468, 0.5
        %v532 = vmul.f32 %v472, 0.5
        %v533 = vmul.f32 %v474, 0.5
        %v534 = vmul.f32 %v476, 0.5
        %v535 = vmul.f32 %v478, 0.5
        %v536 = vmul.f32 %v482, 0.5
        %v537 = vmul.f32 %v484, 0.5
        %v538 = vmul.f32 %v486, 0.5
        %v539 = vmul.f32 %v488, 0.5
        %v540 = vmul.f32 %v492, 0.5
        %v541 = vmul.f32 %v494, 0.5
        %v542 = vmul.f32 %v496, 0.5
        %v543 = vmul.f32 %v498, 0.5
        %v544 = vmul.f32 %v502, 0.5
        %v545 = vmul.f32 %v504, 0.5
        %v546 = vmul.f32 %v506, 0.5
        %v547 = vmul.f32 %v508, 0.5
        %v548 = vmul.f32 %v512, 0.5
        %v549 = vmul.f32 %v514, 0.5
        %v550 = vmul.f32 %v516, 0.5
        %v551 = vmul.f32 %v518, 0.5
        %v552 = vmul.f32 %v442, 0.70710677
        %v553 = vmul.f32 %v444, 0.70710677
        %v554 = vmul.f32 %v446, 0.70710677
        %v555 = vmul.f32 %v448, 0.70710677
        %v556 = vmul.f32 %v452, 0.70710677
        %v557 = vmul.f32 %v454, 0.70710677
        %v558 = vmul.f32 %v456, 0.70710677
        %v559 = vmul.f32 %v458, 0.70710677
        %v560 = vmul.f32 %v462, 0.70710677
        %v561 = vmul.f32 %v464, 0.70710677
        %v562 = vmul.f32 %v466, 0.70710677
        %v563 = vmul.f32 %v468, 0.70710677
        %v564 = vmul.f32 %v472, 0.70710677
        %v565 = vmul.f32 %v474, 0.70710677
        %v566 = vmul.f32 %v476, 0.70710677
        %v567 = vmul.f32 %v478, 0.70710677
        %v568 = vmul.f32 %v482, 0.70710677
        %v569 = vmul.f32 %v484, 0.70710677
        %v570 = vmul.f32 %v486, 0.70710677
        %v571 = vmul.f32 %v488, 0.70710677
        %v572 = vmul.f32 %v492, 0.70710677
        %v573 = vmul.f32 %v494, 0.70710677
        %v574 = vmul.f32 %v496, 0.70710677
        %v575 = vmul.f32 %v498, 0.70710677
        %v576 = vmul.f32 %v502, 0.70710677
        %v577 = vmul.f32 %v504, 0.70710677
        %v578 = vmul.f32 %v506, 0.70710677
        %v579 = vmul.f32 %v508, 0.70710677
        %v580 = vmul.f32 %v512, 0.70710677
        %v581 = vmul.f32 %v514, 0.70710677
        %v582 = vmul.f32 %v516, 0.70710677
        %v583 = vmul.f32 %v518, 0.70710677
        %v584 = vand.u32 2147483647, %v552
        %v585 = vand.u32 2147483647, %v553
        %v586 = vand.u32 2147483647, %v554
        %v587 = vand.u32 2147483647, %v555
        %v588 = vand.u32 2147483647, %v556
        %v589 = vand.u32 2147483647, %v557
        %v590 = vand.u32 2147483647, %v558
        %v591 = vand.u32 2147483647, %v559
        %v592 = vand.u32 2147483647, %v560
        %v593 = vand.u32 2147483647, %v561
        %v594 = vand.u32 2147483647, %v562
        %v595 = vand.u32 2147483647, %v563
        %v596 = vand.u32 2147483647, %v564
        %v597 = vand.u32 2147483647, %v565
        %v598 = vand.u32 2147483647, %v566
        %v599 = vand.u32 2147483647, %v567
        %v600 = vand.u32 2147483647, %v568
        %v601 = vand.u32 2147483647, %v569
        %v602 = vand.u32 2147483647, %v570
        %v603 = vand.u32 2147483647, %v571
        %v604 = vand.u32 2147483647, %v572
        %v605 = vand.u32 2147483647, %v573
        %v606 = vand.u32 2147483647, %v574
        %v607 = vand.u32 2147483647, %v575
        %v608 = vand.u32 2147483647, %v576
        %v609 = vand.u32 2147483647, %v577
        %v610 = vand.u32 2147483647, %v578
        %v611 = vand.u32 2147483647, %v579
        %v612 = vand.u32 2147483647, %v580
        %v613 = vand.u32 2147483647, %v581
        %v614 = vand.u32 2147483647, %v582
        %v615 = vand.u32 2147483647, %v583
        %v616 = vmul.f32 %v584, 0.3275911
        %v617 = vmul.f32 %v585, 0.3275911
        %v618 = vmul.f32 %v586, 0.3275911
        %v619 = vmul.f32 %v587, 0.3275911
        %v620 = vmul.f32 %v588, 0.3275911
        %v621 = vmul.f32 %v589, 0.3275911
        %v622 = vmul.f32 %v590, 0.3275911
        %v623 = vmul.f32 %v591, 0.3275911
        %v624 = vmul.f32 %v592, 0.3275911
        %v625 = vmul.f32 %v593, 0.3275911
        %v626 = vmul.f32 %v594, 0.3275911
        %v627 = vmul.f32 %v595, 0.3275911
        %v628 = vmul.f32 %v596, 0.3275911
        %v629 = vmul.f32 %v597, 0.3275911
        %v630 = vmul.f32 %v598, 0.3275911
        %v631 = vmul.f32 %v599, 0.3275911
        %v632 = vmul.f32 %v600, 0.3275911
        %v633 = vmul.f32 %v601, 0.3275911
        %v634 = vmul.f32 %v602, 0.3275911
        %v635 = vmul.f32 %v603, 0.3275911
        %v636 = vmul.f32 %v604, 0.3275911
        %v637 = vmul.f32 %v605, 0.3275911
        %v638 = vmul.f32 %v606, 0.3275911
        %v639 = vmul.f32 %v607, 0.3275911
        %v640 = vmul.f32 %v608, 0.3275911
        %v641 = vmul.f32 %v609, 0.3275911
        %v642 = vmul.f32 %v610, 0.3275911
        %v643 = vmul.f32 %v611, 0.3275911
        %v644 = vmul.f32 %v612, 0.3275911
        %v645 = vmul.f32 %v613, 0.3275911
        %v646 = vmul.f32 %v614, 0.3275911
        %v647 = vmul.f32 %v615, 0.3275911
        %v648 = vadd.f32 %v616, 1.0
        %v649 = vadd.f32 %v617, 1.0
        %v650 = vadd.f32 %v618, 1.0
        %v651 = vadd.f32 %v619, 1.0
        %v652 = vadd.f32 %v620, 1.0
        %v653 = vadd.f32 %v621, 1.0
        %v654 = vadd.f32 %v622, 1.0
        %v655 = vadd.f32 %v623, 1.0
        %v656 = vadd.f32 %v624, 1.0
        %v657 = vadd.f32 %v625, 1.0
        %v658 = vadd.f32 %v626, 1.0
        %v659 = vadd.f32 %v627, 1.0
        %v660 = vadd.f32 %v628, 1.0
        %v661 = vadd.f32 %v629, 1.0
        %v662 = vadd.f32 %v630, 1.0
        %v663 = vadd.f32 %v631, 1.0
        %v664 = vadd.f32 %v632, 1.0
        %v665 = vadd.f32 %v633, 1.0
        %v666 = vadd.f32 %v634, 1.0
        %v667 = vadd.f32 %v635, 1.0
        %v668 = vadd.f32 %v636, 1.0
        %v669 = vadd.f32 %v637, 1.0
        %v670 = vadd.f32 %v638, 1.0
        %v671 = vadd.f32 %v639, 1.0
        %v672 = vadd.f32 %v640, 1.0
        %v673 = vadd.f32 %v641, 1.0
        %v674 = vadd.f32 %v642, 1.0
        %v675 = vadd.f32 %v643, 1.0
        %v676 = vadd.f32 %v644, 1.0
        %v677 = vadd.f32 %v645, 1.0
        %v678 = vadd.f32 %v646, 1.0
        %v679 = vadd.f32 %v647, 1.0
        %v680 = vrcp.pop %v648
        %v681 = vmul.f32 1.0, %v680
        %v682 = vrcp.pop %v649
        %v683 = vmul.f32 1.0, %v682
        %v684 = vrcp.pop %v650
        %v685 = vmul.f32 1.0, %v684
        %v686 = vrcp.pop %v651
        %v687 = vmul.f32 1.0, %v686
        %v688 = vrcp.pop %v652
        %v689 = vmul.f32 1.0, %v688
        %v690 = vrcp.pop %v653
        %v691 = vmul.f32 1.0, %v690
        %v692 = vrcp.pop %v654
        %v693 = vmul.f32 1.0, %v692
        %v694 = vrcp.pop %v655
        %v695 = vmul.f32 1.0, %v694
        %v696 = vrcp.pop %v656
        %v697 = vmul.f32 1.0, %v696
        %v698 = vrcp.pop %v657
        %v699 = vmul.f32 1.0, %v698
        %v700 = vrcp.pop %v658
        %v701 = vmul.f32 1.0, %v700
        %v702 = vrcp.pop %v659
        %v703 = vmul.f32 1.0, %v702
        %v704 = vrcp.pop %v660
        %v705 = vmul.f32 1.0, %v704
        %v706 = vrcp.pop %v661
        %v707 = vmul.f32 1.0, %v706
        %v708 = vrcp.pop %v662
        %v709 = vmul.f32 1.0, %v708
        %v710 = vrcp.pop %v663
        %v711 = vmul.f32 1.0, %v710
        %v712 = vrcp.pop %v664
        %v713 = vmul.f32 1.0, %v712
        %v714 = vrcp.pop %v665
        %v715 = vmul.f32 1.0, %v714
        %v716 = vrcp.pop %v666
        %v717 = vmul.f32 1.0, %v716
        %v718 = vrcp.pop %v667
        %v719 = vmul.f32 1.0, %v718
        %v720 = vrcp.pop %v668
        %v721 = vmul.f32 1.0, %v720
        %v722 = vrcp.pop %v669
        %v723 = vmul.f32 1.0, %v722
        %v724 = vrcp.pop %v670
        %v725 = vmul.f32 1.0, %v724
        %v726 = vrcp.pop %v671
        %v727 = vmul.f32 1.0, %v726
        %v728 = vrcp.pop %v672
        %v729 = vmul.f32 1.0, %v728
        %v730 = vrcp.pop %v673
        %v731 = vmul.f32 1.0, %v730
        %v732 = vrcp.pop %v674
        %v733 = vmul.f32 1.0, %v732
        %v734 = vrcp.pop %v675
        %v735 = vmul.f32 1.0, %v734
        %v736 = vrcp.pop %v676
        %v737 = vmul.f32 1.0, %v736
        %v738 = vrcp.pop %v677
        %v739 = vmul.f32 1.0, %v738
        %v740 = vrcp.pop %v678
        %v741 = vmul.f32 1.0, %v740
        %v742 = vrcp.pop %v679
        %v743 = vmul.f32 1.0, %v742
        %v744 = vmul.f32 %v681, 1.0614054
        %v745 = vmul.f32 %v683, 1.0614054
        %v746 = vmul.f32 %v685, 1.0614054
        %v747 = vmul.f32 %v687, 1.0614054
        %v748 = vmul.f32 %v689, 1.0614054
        %v749 = vmul.f32 %v691, 1.0614054
        %v750 = vmul.f32 %v693, 1.0614054
        %v751 = vmul.f32 %v695, 1.0614054
        %v752 = vmul.f32 %v697, 1.0614054
        %v753 = vmul.f32 %v699, 1.0614054
        %v754 = vmul.f32 %v701, 1.0614054
        %v755 = vmul.f32 %v703, 1.0614054
        %v756 = vmul.f32 %v705, 1.0614054
        %v757 = vmul.f32 %v707, 1.0614054
        %v758 = vmul.f32 %v709, 1.0614054
        %v759 = vmul.f32 %v711, 1.0614054
        %v760 = vmul.f32 %v713, 1.0614054
        %v761 = vmul.f32 %v715, 1.0614054
        %v762 = vmul.f32 %v717, 1.0614054
        %v763 = vmul.f32 %v719, 1.0614054
        %v764 = vmul.f32 %v721, 1.0614054
        %v765 = vmul.f32 %v723, 1.0614054
        %v766 = vmul.f32 %v725, 1.0614054
        %v767 = vmul.f32 %v727, 1.0614054
        %v768 = vmul.f32 %v729, 1.0614054
        %v769 = vmul.f32 %v731, 1.0614054
        %v770 = vmul.f32 %v733, 1.0614054
        %v771 = vmul.f32 %v735, 1.0614054
        %v772 = vmul.f32 %v737, 1.0614054
        %v773 = vmul.f32 %v739, 1.0614054
        %v774 = vmul.f32 %v741, 1.0614054
        %v775 = vmul.f32 %v743, 1.0614054
        %v776 = vadd.f32 %v744, -1.4531521
        %v777 = vadd.f32 %v745, -1.4531521
        %v778 = vadd.f32 %v746, -1.4531521
        %v779 = vadd.f32 %v747, -1.4531521
        %v780 = vadd.f32 %v748, -1.4531521
        %v781 = vadd.f32 %v749, -1.4531521
        %v782 = vadd.f32 %v750, -1.4531521
        %v783 = vadd.f32 %v751, -1.4531521
        %v784 = vadd.f32 %v752, -1.4531521
        %v785 = vadd.f32 %v753, -1.4531521
        %v786 = vadd.f32 %v754, -1.4531521
        %v787 = vadd.f32 %v755, -1.4531521
        %v788 = vadd.f32 %v756, -1.4531521
        %v789 = vadd.f32 %v757, -1.4531521
        %v790 = vadd.f32 %v758, -1.4531521
        %v791 = vadd.f32 %v759, -1.4531521
        %v792 = vadd.f32 %v760, -1.4531521
        %v793 = vadd.f32 %v761, -1.4531521
        %v794 = vadd.f32 %v762, -1.4531521
        %v795 = vadd.f32 %v763, -1.4531521
        %v796 = vadd.f32 %v764, -1.4531521
        %v797 = vadd.f32 %v765, -1.4531521
        %v798 = vadd.f32 %v766, -1.4531521
        %v799 = vadd.f32 %v767, -1.4531521
        %v800 = vadd.f32 %v768, -1.4531521
        %v801 = vadd.f32 %v769, -1.4531521
        %v802 = vadd.f32 %v770, -1.4531521
        %v803 = vadd.f32 %v771, -1.4531521
        %v804 = vadd.f32 %v772, -1.4531521
        %v805 = vadd.f32 %v773, -1.4531521
        %v806 = vadd.f32 %v774, -1.4531521
        %v807 = vadd.f32 %v775, -1.4531521
        %v808 = vmul.f32 %v776, %v681
        %v809 = vmul.f32 %v777, %v683
        %v810 = vmul.f32 %v778, %v685
        %v811 = vmul.f32 %v779, %v687
        %v812 = vmul.f32 %v780, %v689
        %v813 = vmul.f32 %v781, %v691
        %v814 = vmul.f32 %v782, %v693
        %v815 = vmul.f32 %v783, %v695
        %v816 = vmul.f32 %v784, %v697
        %v817 = vmul.f32 %v785, %v699
        %v818 = vmul.f32 %v786, %v701
        %v819 = vmul.f32 %v787, %v703
        %v820 = vmul.f32 %v788, %v705
        %v821 = vmul.f32 %v789, %v707
        %v822 = vmul.f32 %v790, %v709
        %v823 = vmul.f32 %v791, %v711
        %v824 = vmul.f32 %v792, %v713
        %v825 = vmul.f32 %v793, %v715
        %v826 = vmul.f32 %v794, %v717
        %v827 = vmul.f32 %v795, %v719
        %v828 = vmul.f32 %v796, %v721
        %v829 = vmul.f32 %v797, %v723
        %v830 = vmul.f32 %v798, %v725
        %v831 = vmul.f32 %v799, %v727
        %v832 = vmul.f32 %v800, %v729
        %v833 = vmul.f32 %v801, %v731
        %v834 = vmul.f32 %v802, %v733
        %v835 = vmul.f32 %v803, %v735
        %v836 = vmul.f32 %v804, %v737
        %v837 = vmul.f32 %v805, %v739
        %v838 = vmul.f32 %v806, %v741
        %v839 = vmul.f32 %v807, %v743
        %v840 = vadd.f32 %v808, 1.4214138
        %v841 = vadd.f32 %v809, 1.4214138
        %v842 = vadd.f32 %v810, 1.4214138
        %v843 = vadd.f32 %v811, 1.4214138
        %v844 = vadd.f32 %v812, 1.4214138
        %v845 = vadd.f32 %v813, 1.4214138
        %v846 = vadd.f32 %v814, 1.4214138
        %v847 = vadd.f32 %v815, 1.4214138
        %v848 = vadd.f32 %v816, 1.4214138
        %v849 = vadd.f32 %v817, 1.4214138
        %v850 = vadd.f32 %v818, 1.4214138
        %v851 = vadd.f32 %v819, 1.4214138
        %v852 = vadd.f32 %v820, 1.4214138
        %v853 = vadd.f32 %v821, 1.4214138
        %v854 = vadd.f32 %v822, 1.4214138
        %v855 = vadd.f32 %v823, 1.4214138
        %v856 = vadd.f32 %v824, 1.4214138
        %v857 = vadd.f32 %v825, 1.4214138
        %v858 = vadd.f32 %v826, 1.4214138
        %v859 = vadd.f32 %v827, 1.4214138
        %v860 = vadd.f32 %v828, 1.4214138
        %v861 = vadd.f32 %v829, 1.4214138
        %v862 = vadd.f32 %v830, 1.4214138
        %v863 = vadd.f32 %v831, 1.4214138
        %v864 = vadd.f32 %v832, 1.4214138
        %v865 = vadd.f32 %v833, 1.4214138
        %v866 = vadd.f32 %v834, 1.4214138
        %v867 = vadd.f32 %v835, 1.4214138
        %v868 = vadd.f32 %v836, 1.4214138
        %v869 = vadd.f32 %v837, 1.4214138
        %v870 = vadd.f32 %v838, 1.4214138
        %v871 = vadd.f32 %v839, 1.4214138
        %v872 = vmul.f32 %v840, %v681
        %v873 = vmul.f32 %v841, %v683
        %v874 = vmul.f32 %v842, %v685
        %v875 = vmul.f32 %v843, %v687
        %v876 = vmul.f32 %v844, %v689
        %v877 = vmul.f32 %v845, %v691
        %v878 = vmul.f32 %v846, %v693
        %v879 = vmul.f32 %v847, %v695
        %v880 = vmul.f32 %v848, %v697
        %v881 = vmul.f32 %v849, %v699
        %v882 = vmul.f32 %v850, %v701
        %v883 = vmul.f32 %v851, %v703
        %v884 = vmul.f32 %v852, %v705
        %v885 = vmul.f32 %v853, %v707
        %v886 = vmul.f32 %v854, %v709
        %v887 = vmul.f32 %v855, %v711
        %v888 = vmul.f32 %v856, %v713
        %v889 = vmul.f32 %v857, %v715
        %v890 = vmul.f32 %v858, %v717
        %v891 = vmul.f32 %v859, %v719
        %v892 = vmul.f32 %v860, %v721
        %v893 = vmul.f32 %v861, %v723
        %v894 = vmul.f32 %v862, %v725
        %v895 = vmul.f32 %v863, %v727
        %v896 = vmul.f32 %v864, %v729
        %v897 = vmul.f32 %v865, %v731
        %v898 = vmul.f32 %v866, %v733
        %v899 = vmul.f32 %v867, %v735
        %v900 = vmul.f32 %v868, %v737
        %v901 = vmul.f32 %v869, %v739
        %v902 = vmul.f32 %v870, %v741
        %v903 = vmul.f32 %v871, %v743
        %v904 = vadd.f32 %v872, -0.28449672
        %v905 = vadd.f32 %v873, -0.28449672
        %v906 = vadd.f32 %v874, -0.28449672
        %v907 = vadd.f32 %v875, -0.28449672
        %v908 = vadd.f32 %v876, -0.28449672
        %v909 = vadd.f32 %v877, -0.28449672
        %v910 = vadd.f32 %v878, -0.28449672
        %v911 = vadd.f32 %v879, -0.28449672
        %v912 = vadd.f32 %v880, -0.28449672
        %v913 = vadd.f32 %v881, -0.28449672
        %v914 = vadd.f32 %v882, -0.28449672
        %v915 = vadd.f32 %v883, -0.28449672
        %v916 = vadd.f32 %v884, -0.28449672
        %v917 = vadd.f32 %v885, -0.28449672
        %v918 = vadd.f32 %v886, -0.28449672
        %v919 = vadd.f32 %v887, -0.28449672
        %v920 = vadd.f32 %v888, -0.28449672
        %v921 = vadd.f32 %v889, -0.28449672
        %v922 = vadd.f32 %v890, -0.28449672
        %v923 = vadd.f32 %v891, -0.28449672
        %v924 = vadd.f32 %v892, -0.28449672
        %v925 = vadd.f32 %v893, -0.28449672
        %v926 = vadd.f32 %v894, -0.28449672
        %v927 = vadd.f32 %v895, -0.28449672
        %v928 = vadd.f32 %v896, -0.28449672
        %v929 = vadd.f32 %v897, -0.28449672
        %v930 = vadd.f32 %v898, -0.28449672
        %v931 = vadd.f32 %v899, -0.28449672
        %v932 = vadd.f32 %v900, -0.28449672
        %v933 = vadd.f32 %v901, -0.28449672
        %v934 = vadd.f32 %v902, -0.28449672
        %v935 = vadd.f32 %v903, -0.28449672
        %v936 = vmul.f32 %v904, %v681
        %v937 = vmul.f32 %v905, %v683
        %v938 = vmul.f32 %v906, %v685
        %v939 = vmul.f32 %v907, %v687
        %v940 = vmul.f32 %v908, %v689
        %v941 = vmul.f32 %v909, %v691
        %v942 = vmul.f32 %v910, %v693
        %v943 = vmul.f32 %v911, %v695
        %v944 = vmul.f32 %v912, %v697
        %v945 = vmul.f32 %v913, %v699
        %v946 = vmul.f32 %v914, %v701
        %v947 = vmul.f32 %v915, %v703
        %v948 = vmul.f32 %v916, %v705
        %v949 = vmul.f32 %v917, %v707
        %v950 = vmul.f32 %v918, %v709
        %v951 = vmul.f32 %v919, %v711
        %v952 = vmul.f32 %v920, %v713
        %v953 = vmul.f32 %v921, %v715
        %v954 = vmul.f32 %v922, %v717
        %v955 = vmul.f32 %v923, %v719
        %v956 = vmul.f32 %v924, %v721
        %v957 = vmul.f32 %v925, %v723
        %v958 = vmul.f32 %v926, %v725
        %v959 = vmul.f32 %v927, %v727
        %v960 = vmul.f32 %v928, %v729
        %v961 = vmul.f32 %v929, %v731
        %v962 = vmul.f32 %v930, %v733
        %v963 = vmul.f32 %v931, %v735
        %v964 = vmul.f32 %v932, %v737
        %v965 = vmul.f32 %v933, %v739
        %v966 = vmul.f32 %v934, %v741
        %v967 = vmul.f32 %v935, %v743
        %v968 = vadd.f32 %v936, 0.2548296
        %v969 = vadd.f32 %v937, 0.2548296
        %v970 = vadd.f32 %v938, 0.2548296
        %v971 = vadd.f32 %v939, 0.2548296
        %v972 = vadd.f32 %v940, 0.2548296
        %v973 = vadd.f32 %v941, 0.2548296
        %v974 = vadd.f32 %v942, 0.2548296
        %v975 = vadd.f32 %v943, 0.2548296
        %v976 = vadd.f32 %v944, 0.2548296
        %v977 = vadd.f32 %v945, 0.2548296
        %v978 = vadd.f32 %v946, 0.2548296
        %v979 = vadd.f32 %v947, 0.2548296
        %v980 = vadd.f32 %v948, 0.2548296
        %v981 = vadd.f32 %v949, 0.2548296
        %v982 = vadd.f32 %v950, 0.2548296
        %v983 = vadd.f32 %v951, 0.2548296
        %v984 = vadd.f32 %v952, 0.2548296
        %v985 = vadd.f32 %v953, 0.2548296
        %v986 = vadd.f32 %v954, 0.2548296
        %v987 = vadd.f32 %v955, 0.2548296
        %v988 = vadd.f32 %v956, 0.2548296
        %v989 = vadd.f32 %v957, 0.2548296
        %v990 = vadd.f32 %v958, 0.2548296
        %v991 = vadd.f32 %v959, 0.2548296
        %v992 = vadd.f32 %v960, 0.2548296
        %v993 = vadd.f32 %v961, 0.2548296
        %v994 = vadd.f32 %v962, 0.2548296
        %v995 = vadd.f32 %v963, 0.2548296
        %v996 = vadd.f32 %v964, 0.2548296
        %v997 = vadd.f32 %v965, 0.2548296
        %v998 = vadd.f32 %v966, 0.2548296
        %v999 = vadd.f32 %v967, 0.2548296
        %v1000 = vmul.f32 %v968, %v681
        %v1001 = vmul.f32 %v969, %v683
        %v1002 = vmul.f32 %v970, %v685
        %v1003 = vmul.f32 %v971, %v687
        %v1004 = vmul.f32 %v972, %v689
        %v1005 = vmul.f32 %v973, %v691
        %v1006 = vmul.f32 %v974, %v693
        %v1007 = vmul.f32 %v975, %v695
        %v1008 = vmul.f32 %v976, %v697
        %v1009 = vmul.f32 %v977, %v699
        %v1010 = vmul.f32 %v978, %v701
        %v1011 = vmul.f32 %v979, %v703
        %v1012 = vmul.f32 %v980, %v705
        %v1013 = vmul.f32 %v981, %v707
        %v1014 = vmul.f32 %v982, %v709
        %v1015 = vmul.f32 %v983, %v711
        %v1016 = vmul.f32 %v984, %v713
        %v1017 = vmul.f32 %v985, %v715
        %v1018 = vmul.f32 %v986, %v717
        %v1019 = vmul.f32 %v987, %v719
        %v1020 = vmul.f32 %v988, %v721
        %v1021 = vmul.f32 %v989, %v723
        %v1022 = vmul.f32 %v990, %v725
        %v1023 = vmul.f32 %v991, %v727
        %v1024 = vmul.f32 %v992, %v729
        %v1025 = vmul.f32 %v993, %v731
        %v1026 = vmul.f32 %v994, %v733
        %v1027 = vmul.f32 %v995, %v735
        %v1028 = vmul.f32 %v996, %v737
        %v1029 = vmul.f32 %v997, %v739
        %v1030 = vmul.f32 %v998, %v741
        %v1031 = vmul.f32 %v999, %v743
        %v1032 = vsub.f32 0.0, %v584
        %v1033 = vsub.f32 0.0, %v585
        %v1034 = vsub.f32 0.0, %v586
        %v1035 = vsub.f32 0.0, %v587
        %v1036 = vsub.f32 0.0, %v588
        %v1037 = vsub.f32 0.0, %v589
        %v1038 = vsub.f32 0.0, %v590
        %v1039 = vsub.f32 0.0, %v591
        %v1040 = vsub.f32 0.0, %v592
        %v1041 = vsub.f32 0.0, %v593
        %v1042 = vsub.f32 0.0, %v594
        %v1043 = vsub.f32 0.0, %v595
        %v1044 = vsub.f32 0.0, %v596
        %v1045 = vsub.f32 0.0, %v597
        %v1046 = vsub.f32 0.0, %v598
        %v1047 = vsub.f32 0.0, %v599
        %v1048 = vsub.f32 0.0, %v600
        %v1049 = vsub.f32 0.0, %v601
        %v1050 = vsub.f32 0.0, %v602
        %v1051 = vsub.f32 0.0, %v603
        %v1052 = vsub.f32 0.0, %v604
        %v1053 = vsub.f32 0.0, %v605
        %v1054 = vsub.f32 0.0, %v606
        %v1055 = vsub.f32 0.0, %v607
        %v1056 = vsub.f32 0.0, %v608
        %v1057 = vsub.f32 0.0, %v609
        %v1058 = vsub.f32 0.0, %v610
        %v1059 = vsub.f32 0.0, %v611
        %v1060 = vsub.f32 0.0, %v612
        %v1061 = vsub.f32 0.0, %v613
        %v1062 = vsub.f32 0.0, %v614
        %v1063 = vsub.f32 0.0, %v615
        %v1064 = vmul.f32 %v1032, %v584
        %v1065 = vmul.f32 %v1033, %v585
        %v1066 = vmul.f32 %v1034, %v586
        %v1067 = vmul.f32 %v1035, %v587
        %v1068 = vmul.f32 %v1036, %v588
        %v1069 = vmul.f32 %v1037, %v589
        %v1070 = vmul.f32 %v1038, %v590
        %v1071 = vmul.f32 %v1039, %v591
        %v1072 = vmul.f32 %v1040, %v592
        %v1073 = vmul.f32 %v1041, %v593
        %v1074 = vmul.f32 %v1042, %v594
        %v1075 = vmul.f32 %v1043, %v595
        %v1076 = vmul.f32 %v1044, %v596
        %v1077 = vmul.f32 %v1045, %v597
        %v1078 = vmul.f32 %v1046, %v598
        %v1079 = vmul.f32 %v1047, %v599
        %v1080 = vmul.f32 %v1048, %v600
        %v1081 = vmul.f32 %v1049, %v601
        %v1082 = vmul.f32 %v1050, %v602
        %v1083 = vmul.f32 %v1051, %v603
        %v1084 = vmul.f32 %v1052, %v604
        %v1085 = vmul.f32 %v1053, %v605
        %v1086 = vmul.f32 %v1054, %v606
        %v1087 = vmul.f32 %v1055, %v607
        %v1088 = vmul.f32 %v1056, %v608
        %v1089 = vmul.f32 %v1057, %v609
        %v1090 = vmul.f32 %v1058, %v610
        %v1091 = vmul.f32 %v1059, %v611
        %v1092 = vmul.f32 %v1060, %v612
        %v1093 = vmul.f32 %v1061, %v613
        %v1094 = vmul.f32 %v1062, %v614
        %v1095 = vmul.f32 %v1063, %v615
        %v1096 = vmul.f32 %v1064, 1.442695
        %v1097 = vpow.pop %v1096
        %v1098 = vmul.f32 %v1065, 1.442695
        %v1099 = vpow.pop %v1098
        %v1100 = vmul.f32 %v1066, 1.442695
        %v1101 = vpow.pop %v1100
        %v1102 = vmul.f32 %v1067, 1.442695
        %v1103 = vpow.pop %v1102
        %v1104 = vmul.f32 %v1068, 1.442695
        %v1105 = vpow.pop %v1104
        %v1106 = vmul.f32 %v1069, 1.442695
        %v1107 = vpow.pop %v1106
        %v1108 = vmul.f32 %v1070, 1.442695
        %v1109 = vpow.pop %v1108
        %v1110 = vmul.f32 %v1071, 1.442695
        %v1111 = vpow.pop %v1110
        %v1112 = vmul.f32 %v1072, 1.442695
        %v1113 = vpow.pop %v1112
        %v1114 = vmul.f32 %v1073, 1.442695
        %v1115 = vpow.pop %v1114
        %v1116 = vmul.f32 %v1074, 1.442695
        %v1117 = vpow.pop %v1116
        %v1118 = vmul.f32 %v1075, 1.442695
        %v1119 = vpow.pop %v1118
        %v1120 = vmul.f32 %v1076, 1.442695
        %v1121 = vpow.pop %v1120
        %v1122 = vmul.f32 %v1077, 1.442695
        %v1123 = vpow.pop %v1122
        %v1124 = vmul.f32 %v1078, 1.442695
        %v1125 = vpow.pop %v1124
        %v1126 = vmul.f32 %v1079, 1.442695
        %v1127 = vpow.pop %v1126
        %v1128 = vmul.f32 %v1080, 1.442695
        %v1129 = vpow.pop %v1128
        %v1130 = vmul.f32 %v1081, 1.442695
        %v1131 = vpow.pop %v1130
        %v1132 = vmul.f32 %v1082, 1.442695
        %v1133 = vpow.pop %v1132
        %v1134 = vmul.f32 %v1083, 1.442695
        %v1135 = vpow.pop %v1134
        %v1136 = vmul.f32 %v1084, 1.442695
        %v1137 = vpow.pop %v1136
        %v1138 = vmul.f32 %v1085, 1.442695
        %v1139 = vpow.pop %v1138
        %v1140 = vmul.f32 %v1086, 1.442695
        %v1141 = vpow.pop %v1140
        %v1142 = vmul.f32 %v1087, 1.442695
        %v1143 = vpow.pop %v1142
        %v1144 = vmul.f32 %v1088, 1.442695
        %v1145 = vpow.pop %v1144
        %v1146 = vmul.f32 %v1089, 1.442695
        %v1147 = vpow.pop %v1146
        %v1148 = vmul.f32 %v1090, 1.442695
        %v1149 = vpow.pop %v1148
        %v1150 = vmul.f32 %v1091, 1.442695
        %v1151 = vpow.pop %v1150
        %v1152 = vmul.f32 %v1092, 1.442695
        %v1153 = vpow.pop %v1152
        %v1154 = vmul.f32 %v1093, 1.442695
        %v1155 = vpow.pop %v1154
        %v1156 = vmul.f32 %v1094, 1.442695
        %v1157 = vpow.pop %v1156
        %v1158 = vmul.f32 %v1095, 1.442695
        %v1159 = vpow.pop %v1158
        %v1160 = vmul.f32 %v1000, %v1097
        %v1161 = vmul.f32 %v1001, %v1099
        %v1162 = vmul.f32 %v1002, %v1101
        %v1163 = vmul.f32 %v1003, %v1103
        %v1164 = vmul.f32 %v1004, %v1105
        %v1165 = vmul.f32 %v1005, %v1107
        %v1166 = vmul.f32 %v1006, %v1109
        %v1167 = vmul.f32 %v1007, %v1111
        %v1168 = vmul.f32 %v1008, %v1113
        %v1169 = vmul.f32 %v1009, %v1115
        %v1170 = vmul.f32 %v1010, %v1117
        %v1171 = vmul.f32 %v1011, %v1119
        %v1172 = vmul.f32 %v1012, %v1121
        %v1173 = vmul.f32 %v1013, %v1123
        %v1174 = vmul.f32 %v1014, %v1125
        %v1175 = vmul.f32 %v1015, %v1127
        %v1176 = vmul.f32 %v1016, %v1129
        %v1177 = vmul.f32 %v1017, %v1131
        %v1178 = vmul.f32 %v1018, %v1133
        %v1179 = vmul.f32 %v1019, %v1135
        %v1180 = vmul.f32 %v1020, %v1137
        %v1181 = vmul.f32 %v1021, %v1139
        %v1182 = vmul.f32 %v1022, %v1141
        %v1183 = vmul.f32 %v1023, %v1143
        %v1184 = vmul.f32 %v1024, %v1145
        %v1185 = vmul.f32 %v1025, %v1147
        %v1186 = vmul.f32 %v1026, %v1149
        %v1187 = vmul.f32 %v1027, %v1151
        %v1188 = vmul.f32 %v1028, %v1153
        %v1189 = vmul.f32 %v1029, %v1155
        %v1190 = vmul.f32 %v1030, %v1157
        %v1191 = vmul.f32 %v1031, %v1159
        %v1192 = vsub.f32 1.0, %v1160
        %v1193 = vsub.f32 1.0, %v1161
        %v1194 = vsub.f32 1.0, %v1162
        %v1195 = vsub.f32 1.0, %v1163
        %v1196 = vsub.f32 1.0, %v1164
        %v1197 = vsub.f32 1.0, %v1165
        %v1198 = vsub.f32 1.0, %v1166
        %v1199 = vsub.f32 1.0, %v1167
        %v1200 = vsub.f32 1.0, %v1168
        %v1201 = vsub.f32 1.0, %v1169
        %v1202 = vsub.f32 1.0, %v1170
        %v1203 = vsub.f32 1.0, %v1171
        %v1204 = vsub.f32 1.0, %v1172
        %v1205 = vsub.f32 1.0, %v1173
        %v1206 = vsub.f32 1.0, %v1174
        %v1207 = vsub.f32 1.0, %v1175
        %v1208 = vsub.f32 1.0, %v1176
        %v1209 = vsub.f32 1.0, %v1177
        %v1210 = vsub.f32 1.0, %v1178
        %v1211 = vsub.f32 1.0, %v1179
        %v1212 = vsub.f32 1.0, %v1180
        %v1213 = vsub.f32 1.0, %v1181
        %v1214 = vsub.f32 1.0, %v1182
        %v1215 = vsub.f32 1.0, %v1183
        %v1216 = vsub.f32 1.0, %v1184
        %v1217 = vsub.f32 1.0, %v1185
        %v1218 = vsub.f32 1.0, %v1186
        %v1219 = vsub.f32 1.0, %v1187
        %v1220 = vsub.f32 1.0, %v1188
        %v1221 = vsub.f32 1.0, %v1189
        %v1222 = vsub.f32 1.0, %v1190
        %v1223 = vsub.f32 1.0, %v1191
        %vm1224 = vcmp.ge.f32.partialorder %v552, 0.0
        %vm1225 = vcmp.ge.f32.partialorder %v553, 0.0
        %vm1226 = vcmp.ge.f32.partialorder %v554, 0.0
        %vm1227 = vcmp.ge.f32.partialorder %v555, 0.0
        %vm1228 = vcmp.ge.f32.partialorder %v556, 0.0
        %vm1229 = vcmp.ge.f32.partialorder %v557, 0.0
        %vm1230 = vcmp.ge.f32.partialorder %v558, 0.0
        %vm1231 = vcmp.ge.f32.partialorder %v559, 0.0
        %vm1232 = vcmp.ge.f32.partialorder %v560, 0.0
        %vm1233 = vcmp.ge.f32.partialorder %v561, 0.0
        %vm1234 = vcmp.ge.f32.partialorder %v562, 0.0
        %vm1235 = vcmp.ge.f32.partialorder %v563, 0.0
        %vm1236 = vcmp.ge.f32.partialorder %v564, 0.0
        %vm1237 = vcmp.ge.f32.partialorder %v565, 0.0
        %vm1238 = vcmp.ge.f32.partialorder %v566, 0.0
        %vm1239 = vcmp.ge.f32.partialorder %v567, 0.0
        %vm1240 = vcmp.ge.f32.partialorder %v568, 0.0
        %vm1241 = vcmp.ge.f32.partialorder %v569, 0.0
        %vm1242 = vcmp.ge.f32.partialorder %v570, 0.0
        %vm1243 = vcmp.ge.f32.partialorder %v571, 0.0
        %vm1244 = vcmp.ge.f32.partialorder %v572, 0.0
        %vm1245 = vcmp.ge.f32.partialorder %v573, 0.0
        %vm1246 = vcmp.ge.f32.partialorder %v574, 0.0
        %vm1247 = vcmp.ge.f32.partialorder %v575, 0.0
        %vm1248 = vcmp.ge.f32.partialorder %v576, 0.0
        %vm1249 = vcmp.ge.f32.partialorder %v577, 0.0
        %vm1250 = vcmp.ge.f32.partialorder %v578, 0.0
        %vm1251 = vcmp.ge.f32.partialorder %v579, 0.0
        %vm1252 = vcmp.ge.f32.partialorder %v580, 0.0
        %vm1253 = vcmp.ge.f32.partialorder %v581, 0.0
        %vm1254 = vcmp.ge.f32.partialorder %v582, 0.0
        %vm1255 = vcmp.ge.f32.partialorder %v583, 0.0
        %v1256 = vsub.f32 0.0, %v1192
        %v1257 = vsub.f32 0.0, %v1193
        %v1258 = vsub.f32 0.0, %v1194
        %v1259 = vsub.f32 0.0, %v1195
        %v1260 = vsub.f32 0.0, %v1196
        %v1261 = vsub.f32 0.0, %v1197
        %v1262 = vsub.f32 0.0, %v1198
        %v1263 = vsub.f32 0.0, %v1199
        %v1264 = vsub.f32 0.0, %v1200
        %v1265 = vsub.f32 0.0, %v1201
        %v1266 = vsub.f32 0.0, %v1202
        %v1267 = vsub.f32 0.0, %v1203
        %v1268 = vsub.f32 0.0, %v1204
        %v1269 = vsub.f32 0.0, %v1205
        %v1270 = vsub.f32 0.0, %v1206
        %v1271 = vsub.f32 0.0, %v1207
        %v1272 = vsub.f32 0.0, %v1208
        %v1273 = vsub.f32 0.0, %v1209
        %v1274 = vsub.f32 0.0, %v1210
        %v1275 = vsub.f32 0.0, %v1211
        %v1276 = vsub.f32 0.0, %v1212
        %v1277 = vsub.f32 0.0, %v1213
        %v1278 = vsub.f32 0.0, %v1214
        %v1279 = vsub.f32 0.0, %v1215
        %v1280 = vsub.f32 0.0, %v1216
        %v1281 = vsub.f32 0.0, %v1217
        %v1282 = vsub.f32 0.0, %v1218
        %v1283 = vsub.f32 0.0, %v1219
        %v1284 = vsub.f32 0.0, %v1220
        %v1285 = vsub.f32 0.0, %v1221
        %v1286 = vsub.f32 0.0, %v1222
        %v1287 = vsub.f32 0.0, %v1223
        %v1288 = vsel %vm1224, %v1192, %v1256
        %v1289 = vsel %vm1225, %v1193, %v1257
        %v1290 = vsel %vm1226, %v1194, %v1258
        %v1291 = vsel %vm1227, %v1195, %v1259
        %v1292 = vsel %vm1228, %v1196, %v1260
        %v1293 = vsel %vm1229, %v1197, %v1261
        %v1294 = vsel %vm1230, %v1198, %v1262
        %v1295 = vsel %vm1231, %v1199, %v1263
        %v1296 = vsel %vm1232, %v1200, %v1264
        %v1297 = vsel %vm1233, %v1201, %v1265
        %v1298 = vsel %vm1234, %v1202, %v1266
        %v1299 = vsel %vm1235, %v1203, %v1267
        %v1300 = vsel %vm1236, %v1204, %v1268
        %v1301 = vsel %vm1237, %v1205, %v1269
        %v1302 = vsel %vm1238, %v1206, %v1270
        %v1303 = vsel %vm1239, %v1207, %v1271
        %v1304 = vsel %vm1240, %v1208, %v1272
        %v1305 = vsel %vm1241, %v1209, %v1273
        %v1306 = vsel %vm1242, %v1210, %v1274
        %v1307 = vsel %vm1243, %v1211, %v1275
        %v1308 = vsel %vm1244, %v1212, %v1276
        %v1309 = vsel %vm1245, %v1213, %v1277
        %v1310 = vsel %vm1246, %v1214, %v1278
        %v1311 = vsel %vm1247, %v1215, %v1279
        %v1312 = vsel %vm1248, %v1216, %v1280
        %v1313 = vsel %vm1249, %v1217, %v1281
        %v1314 = vsel %vm1250, %v1218, %v1282
        %v1315 = vsel %vm1251, %v1219, %v1283
        %v1316 = vsel %vm1252, %v1220, %v1284
        %v1317 = vsel %vm1253, %v1221, %v1285
        %v1318 = vsel %vm1254, %v1222, %v1286
        %v1319 = vsel %vm1255, %v1223, %v1287
        %v1320 = vadd.f32 %v1288, 1.0
        %v1321 = vadd.f32 %v1289, 1.0
        %v1322 = vadd.f32 %v1290, 1.0
        %v1323 = vadd.f32 %v1291, 1.0
        %v1324 = vadd.f32 %v1292, 1.0
        %v1325 = vadd.f32 %v1293, 1.0
        %v1326 = vadd.f32 %v1294, 1.0
        %v1327 = vadd.f32 %v1295, 1.0
        %v1328 = vadd.f32 %v1296, 1.0
        %v1329 = vadd.f32 %v1297, 1.0
        %v1330 = vadd.f32 %v1298, 1.0
        %v1331 = vadd.f32 %v1299, 1.0
        %v1332 = vadd.f32 %v1300, 1.0
        %v1333 = vadd.f32 %v1301, 1.0
        %v1334 = vadd.f32 %v1302, 1.0
        %v1335 = vadd.f32 %v1303, 1.0
        %v1336 = vadd.f32 %v1304, 1.0
        %v1337 = vadd.f32 %v1305, 1.0
        %v1338 = vadd.f32 %v1306, 1.0
        %v1339 = vadd.f32 %v1307, 1.0
        %v1340 = vadd.f32 %v1308, 1.0
        %v1341 = vadd.f32 %v1309, 1.0
        %v1342 = vadd.f32 %v1310, 1.0
        %v1343 = vadd.f32 %v1311, 1.0
        %v1344 = vadd.f32 %v1312, 1.0
        %v1345 = vadd.f32 %v1313, 1.0
        %v1346 = vadd.f32 %v1314, 1.0
        %v1347 = vadd.f32 %v1315, 1.0
        %v1348 = vadd.f32 %v1316, 1.0
        %v1349 = vadd.f32 %v1317, 1.0
        %v1350 = vadd.f32 %v1318, 1.0
        %v1351 = vadd.f32 %v1319, 1.0
        %v1352 = vmul.f32 %v520, %v1320
        %v1353 = vmul.f32 %v521, %v1321
        %v1354 = vmul.f32 %v522, %v1322
        %v1355 = vmul.f32 %v523, %v1323
        %v1356 = vmul.f32 %v524, %v1324
        %v1357 = vmul.f32 %v525, %v1325
        %v1358 = vmul.f32 %v526, %v1326
        %v1359 = vmul.f32 %v527, %v1327
        %v1360 = vmul.f32 %v528, %v1328
        %v1361 = vmul.f32 %v529, %v1329
        %v1362 = vmul.f32 %v530, %v1330
        %v1363 = vmul.f32 %v531, %v1331
        %v1364 = vmul.f32 %v532, %v1332
        %v1365 = vmul.f32 %v533, %v1333
        %v1366 = vmul.f32 %v534, %v1334
        %v1367 = vmul.f32 %v535, %v1335
        %v1368 = vmul.f32 %v536, %v1336
        %v1369 = vmul.f32 %v537, %v1337
        %v1370 = vmul.f32 %v538, %v1338
        %v1371 = vmul.f32 %v539, %v1339
        %v1372 = vmul.f32 %v540, %v1340
        %v1373 = vmul.f32 %v541, %v1341
        %v1374 = vmul.f32 %v542, %v1342
        %v1375 = vmul.f32 %v543, %v1343
        %v1376 = vmul.f32 %v544, %v1344
        %v1377 = vmul.f32 %v545, %v1345
        %v1378 = vmul.f32 %v546, %v1346
        %v1379 = vmul.f32 %v547, %v1347
        %v1380 = vmul.f32 %v548, %v1348
        %v1381 = vmul.f32 %v549, %v1349
        %v1382 = vmul.f32 %v550, %v1350
        %v1383 = vmul.f32 %v551, %v1351
        %v1384 = vpack.c.bf16 %v1354, %v1352
        %v1385 = vpack.c.bf16 %v1355, %v1353
        %v1386 = vpack.c.bf16 %v1358, %v1356
        %v1387 = vpack.c.bf16 %v1359, %v1357
        %v1388 = vpack.c.bf16 %v1362, %v1360
        %v1389 = vpack.c.bf16 %v1363, %v1361
        %v1390 = vpack.c.bf16 %v1366, %v1364
        %v1391 = vpack.c.bf16 %v1367, %v1365
        %v1392 = vpack.c.bf16 %v1370, %v1368
        %v1393 = vpack.c.bf16 %v1371, %v1369
        %v1394 = vpack.c.bf16 %v1374, %v1372
        %v1395 = vpack.c.bf16 %v1375, %v1373
        %v1396 = vpack.c.bf16 %v1378, %v1376
        %v1397 = vpack.c.bf16 %v1379, %v1377
        %v1398 = vpack.c.bf16 %v1382, %v1380
        %v1399 = vpack.c.bf16 %v1383, %v1381
        %v1400 = vld [vmem:[#allocation7] sm:$0xf]
        %v1401 = vld [vmem:[#allocation7 + $0x4] sm:$0xf]
        %v1402 = vld [vmem:[#allocation7 + $0x8] sm:$0xf]
        %v1403 = vld [vmem:[#allocation7 + $0xc] sm:$0xf]
        %v1404 = vld [vmem:[#allocation7 + $0x10] sm:$0xf]
        %v1405 = vld [vmem:[#allocation7 + $0x14] sm:$0xf]
        %v1406 = vld [vmem:[#allocation7 + $0x18] sm:$0xf]
        %v1407 = vld [vmem:[#allocation7 + $0x1c] sm:$0xf]
        %v1408 = vld [vmem:[#allocation7 + $0x20] sm:$0xf]
        %v1409 = vld [vmem:[#allocation7 + $0x24] sm:$0xf]
        %v1410 = vld [vmem:[#allocation7 + $0x28] sm:$0xf]
        %v1411 = vld [vmem:[#allocation7 + $0x2c] sm:$0xf]
        %v1412 = vld [vmem:[#allocation7 + $0x30] sm:$0xf]
        %v1413 = vld [vmem:[#allocation7 + $0x34] sm:$0xf]
        %v1414 = vld [vmem:[#allocation7 + $0x38] sm:$0xf]
        %v1415 = vld [vmem:[#allocation7 + $0x3c] sm:$0xf]
        %v1416 = vld [vmem:[#allocation7 + $0x40] sm:$0xf]
        %v1417 = vld [vmem:[#allocation7 + $0x44] sm:$0xf]
        %v1418 = vld [vmem:[#allocation7 + $0x48] sm:$0xf]
        %v1419 = vld [vmem:[#allocation7 + $0x4c] sm:$0xf]
        %v1420 = vld [vmem:[#allocation7 + $0x50] sm:$0xf]
        %v1421 = vld [vmem:[#allocation7 + $0x54] sm:$0xf]
        %v1422 = vld [vmem:[#allocation7 + $0x58] sm:$0xf]
        %v1423 = vld [vmem:[#allocation7 + $0x5c] sm:$0xf]
        %v1424 = vld [vmem:[#allocation7 + $0x60] sm:$0xf]
        %v1425 = vld [vmem:[#allocation7 + $0x64] sm:$0xf]
        %v1426 = vld [vmem:[#allocation7 + $0x68] sm:$0xf]
        %v1427 = vld [vmem:[#allocation7 + $0x6c] sm:$0xf]
        %v1428 = vld [vmem:[#allocation7 + $0x70] sm:$0xf]
        %v1429 = vld [vmem:[#allocation7 + $0x74] sm:$0xf]
        %v1430 = vld [vmem:[#allocation7 + $0x78] sm:$0xf]
        %v1431 = vld [vmem:[#allocation7 + $0x7c] sm:$0xf]
        %v1432 = vld [vmem:[%s4] sm:$0x1]
        %v1434 = vlaneseq
        %v1435 = vshrl.u32 %v1434, 7
        %v1436 = vsub.s32 0, %v1435
        %v1437 = vrot.slane %v1432, %v1436
        %v1471 = vunpack.c.l.b16 %v1400
        %v1472 = vunpack.c.l.b16 %v1401
        %v1473 = vunpack.c.l.b16 %v1402
        %v1474 = vunpack.c.l.b16 %v1403
        %v1475 = vunpack.c.l.b16 %v1404
        %v1476 = vunpack.c.l.b16 %v1405
        %v1477 = vunpack.c.l.b16 %v1406
        %v1478 = vunpack.c.l.b16 %v1407
        %v1479 = vunpack.c.l.b16 %v1408
        %v1480 = vunpack.c.l.b16 %v1409
        %v1481 = vunpack.c.l.b16 %v1410
        %v1482 = vunpack.c.l.b16 %v1411
        %v1483 = vunpack.c.l.b16 %v1412
        %v1484 = vunpack.c.l.b16 %v1413
        %v1485 = vunpack.c.l.b16 %v1414
        %v1486 = vunpack.c.l.b16 %v1415
        %v1487 = vunpack.c.l.b16 %v1416
        %v1488 = vunpack.c.l.b16 %v1417
        %v1489 = vunpack.c.l.b16 %v1418
        %v1490 = vunpack.c.l.b16 %v1419
        %v1491 = vunpack.c.l.b16 %v1420
        %v1492 = vunpack.c.l.b16 %v1421
        %v1493 = vunpack.c.l.b16 %v1422
        %v1494 = vunpack.c.l.b16 %v1423
        %v1495 = vunpack.c.l.b16 %v1424
        %v1496 = vunpack.c.l.b16 %v1425
        %v1497 = vunpack.c.l.b16 %v1426
        %v1498 = vunpack.c.l.b16 %v1427
        %v1499 = vunpack.c.l.b16 %v1428
        %v1500 = vunpack.c.l.b16 %v1429
        %v1501 = vunpack.c.l.b16 %v1430
        %v1502 = vunpack.c.l.b16 %v1431
        %v1503 = vpack.c.b16 %v1472, %v1471
        %v1504 = vpack.c.b16 %v1474, %v1473
        %v1505 = vpack.c.b16 %v1476, %v1475
        %v1506 = vpack.c.b16 %v1478, %v1477
        %v1507 = vpack.c.b16 %v1480, %v1479
        %v1508 = vpack.c.b16 %v1482, %v1481
        %v1509 = vpack.c.b16 %v1484, %v1483
        %v1510 = vpack.c.b16 %v1486, %v1485
        %v1511 = vpack.c.b16 %v1488, %v1487
        %v1512 = vpack.c.b16 %v1490, %v1489
        %v1513 = vpack.c.b16 %v1492, %v1491
        %v1514 = vpack.c.b16 %v1494, %v1493
        %v1515 = vpack.c.b16 %v1496, %v1495
        %v1516 = vpack.c.b16 %v1498, %v1497
        %v1517 = vpack.c.b16 %v1500, %v1499
        %v1518 = vpack.c.b16 %v1502, %v1501
        %1535 = vmatprep.subr.bf16.mxu0 0
        %1536 = vmatpush1.bf16.msra.mxu0 %v1510
        %1537 = vmatprep.subr.bf16.mxu0 0
        %1538 = vmatpush1.bf16.msra.mxu0 %v1509
        %1539 = vmatprep.subr.bf16.mxu0 0
        %1540 = vmatpush1.bf16.msra.mxu0 %v1508
        %1541 = vmatprep.subr.bf16.mxu0 0
        %1542 = vmatpush1.bf16.msra.mxu0 %v1507
        %1543 = vmatprep.subr.bf16.mxu0 0
        %1544 = vmatpush1.bf16.msra.mxu0 %v1506
        %1545 = vmatprep.subr.bf16.mxu0 0
        %1546 = vmatpush1.bf16.msra.mxu0 %v1505
        %1547 = vmatprep.subr.bf16.mxu0 0
        %1548 = vmatpush1.bf16.msra.mxu0 %v1504
        %1549 = vmatprep.subr.bf16.mxu0 0
        %1550 = vmatpush1.bf16.msra.mxu0 %v1503
        %1551 = vmatprep.subr.bf16.mxu0 0
        %1552 = vmatpush2.bf16.msra.mxu0 %v1518
        %1553 = vmatprep.subr.bf16.mxu0 0
        %1554 = vmatpush2.bf16.msra.mxu0 %v1517
        %1555 = vmatprep.subr.bf16.mxu0 0
        %1556 = vmatpush2.bf16.msra.mxu0 %v1516
        %1557 = vmatprep.subr.bf16.mxu0 0
        %1558 = vmatpush2.bf16.msra.mxu0 %v1515
        %1559 = vmatprep.subr.bf16.mxu0 0
        %1560 = vmatpush2.bf16.msra.mxu0 %v1514
        %1561 = vmatprep.subr.bf16.mxu0 0
        %1562 = vmatpush2.bf16.msra.mxu0 %v1513
        %1563 = vmatprep.subr.bf16.mxu0 0
        %1564 = vmatpush2.bf16.msra.mxu0 %v1512
        %1565 = vmatprep.subr.bf16.mxu0 0
        %1566 = vmatpush2.bf16.msra.mxu0 %v1511
        %1567 = vmatprep.mubr.bf16.mxu0 %v1385
        %1568 = vmatmul.mubr.bf16.gmra.mxu0 %v1384
        %v1569 = vpop.f32.mrf.mxu0
        %v1570 = vadd.f32 %v1437, %v1569
        %v1571 = vpop.f32.mrf.mxu0
        %v1572 = vpop.f32.mrf.mxu0
        %v1573 = vadd.f32 %v1437, %v1572
        %v1574 = vpop.f32.mrf.mxu0
        %1575 = vmatprep.mubr.bf16.mxu0 %v1387
        %1576 = vmatmul.mubr.bf16.gmra.mxu0 %v1386
        %v1577 = vpop.f32.mrf.mxu0
        %v1578 = vadd.f32 %v1437, %v1577
        %v1579 = vpop.f32.mrf.mxu0
        %v1580 = vpop.f32.mrf.mxu0
        %v1581 = vadd.f32 %v1437, %v1580
        %v1582 = vpop.f32.mrf.mxu0
        %1583 = vmatprep.mubr.bf16.mxu0 %v1389
        %1584 = vmatmul.mubr.bf16.gmra.mxu0 %v1388
        %v1585 = vpop.f32.mrf.mxu0
        %v1586 = vadd.f32 %v1437, %v1585
        %v1587 = vpop.f32.mrf.mxu0
        %v1588 = vpop.f32.mrf.mxu0
        %v1589 = vadd.f32 %v1437, %v1588
        %v1590 = vpop.f32.mrf.mxu0
        %1591 = vmatprep.mubr.bf16.mxu0 %v1391
        %1592 = vmatmul.mubr.bf16.gmra.mxu0 %v1390
        %v1593 = vpop.f32.mrf.mxu0
        %v1594 = vadd.f32 %v1437, %v1593
        %v1595 = vpop.f32.mrf.mxu0
        %v1596 = vpop.f32.mrf.mxu0
        %v1597 = vadd.f32 %v1437, %v1596
        %v1598 = vpop.f32.mrf.mxu0
        %1599 = vmatprep.mubr.bf16.mxu0 %v1393
        %1600 = vmatmul.mubr.bf16.gmra.mxu0 %v1392
        %v1601 = vpop.f32.mrf.mxu0
        %v1602 = vadd.f32 %v1437, %v1601
        %v1603 = vpop.f32.mrf.mxu0
        %v1604 = vpop.f32.mrf.mxu0
        %v1605 = vadd.f32 %v1437, %v1604
        %v1606 = vpop.f32.mrf.mxu0
        %1607 = vmatprep.mubr.bf16.mxu0 %v1395
        %1608 = vmatmul.mubr.bf16.gmra.mxu0 %v1394
        %v1609 = vpop.f32.mrf.mxu0
        %v1610 = vadd.f32 %v1437, %v1609
        %v1611 = vpop.f32.mrf.mxu0
        %v1612 = vpop.f32.mrf.mxu0
        %v1613 = vadd.f32 %v1437, %v1612
        %v1614 = vpop.f32.mrf.mxu0
        %1615 = vmatprep.mubr.bf16.mxu0 %v1397
        %1616 = vmatmul.mubr.bf16.gmra.mxu0 %v1396
        %v1617 = vpop.f32.mrf.mxu0
        %v1618 = vadd.f32 %v1437, %v1617
        %v1619 = vpop.f32.mrf.mxu0
        %v1620 = vpop.f32.mrf.mxu0
        %v1621 = vadd.f32 %v1437, %v1620
        %v1622 = vpop.f32.mrf.mxu0
        %1623 = vmatprep.mubr.bf16.mxu0 %v1399
        %1624 = vmatmul.mubr.bf16.gmra.mxu0 %v1398
        %v1625 = vpop.f32.mrf.mxu0
        %v1626 = vadd.f32 %v1437, %v1625
        %v1627 = vpop.f32.mrf.mxu0
        %v1628 = vpop.f32.mrf.mxu0
        %v1629 = vadd.f32 %v1437, %v1628
        %v1630 = vpop.f32.mrf.mxu0
        %1631 = vdwg.mxu0
        %1632 = vst [vmem:[%s271] sm:$0xff] %v1570
        %1633 = vst [vmem:[%s271 + $0x8] sm:$0xff] %v1573
        %1634 = vst [vmem:[%s271 + $0x10] sm:$0xff] %v1578
        %1635 = vst [vmem:[%s271 + $0x18] sm:$0xff] %v1581
        %1636 = vst [vmem:[%s271 + $0x20] sm:$0xff] %v1586
        %1637 = vst [vmem:[%s271 + $0x28] sm:$0xff] %v1589
        %1638 = vst [vmem:[%s271 + $0x30] sm:$0xff] %v1594
        %1639 = vst [vmem:[%s271 + $0x38] sm:$0xff] %v1597
        %1640 = vst [vmem:[%s271 + $0x40] sm:$0xff] %v1602
        %1641 = vst [vmem:[%s271 + $0x48] sm:$0xff] %v1605
        %1642 = vst [vmem:[%s271 + $0x50] sm:$0xff] %v1610
        %1643 = vst [vmem:[%s271 + $0x58] sm:$0xff] %v1613
        %1644 = vst [vmem:[%s271 + $0x60] sm:$0xff] %v1618
        %1645 = vst [vmem:[%s271 + $0x68] sm:$0xff] %v1621
        %1646 = vst [vmem:[%s271 + $0x70] sm:$0xff] %v1626
        %1647 = vst [vmem:[%s271 + $0x78] sm:$0xff] %v1629
        %s1648 = sand.u32 %s141, 1
        %s1649 = scalar_lea.sflag [#allocation4], %s1648
        %s1650 = sand.u32 %s141, 1
        %s1651 = smul.addr %s1650, 128
        %s1652 = scalar_lea.vmem [#allocation8], %s1651
        // Predicated region
        $region53: #{tpu_custom_call.1} parent=39 // pred_check
          %p1653 = pneg %p151
        $region54: #{tpu_custom_call.1} parent=39 // pred_check_branch
          %1655 = sbr.rel (%p1653) target = $region56
        $region55: #{tpu_custom_call.1} parent=39 // pred_region
          %s1656 = smul.u32 16, %s23
          %s1658 = ssub.s32 2048, 2048
          %1659 = vsyncadd %s1649, %s1658
          %s1660 = smul.addr %s1656, 128
          %s1661 = scalar_lea.hbm %s5, %s1660
          %s1662 = sshll.u32 %s1652, 4
          %s1663 = int_to_ptr.vmem [resolvable:$true] %s1662
          %1668 = dma.vmem_to_hbm [thread:$0]  %s1663, 2048, %s1661, %s1649, 128, 128, 8
        $region56: #{tpu_custom_call.1} parent=39 // pred_fallthru
          _
      $region40: #{tpu_custom_call.1} parent=5 // pred_fallthru
        _
      %p1669 = scmp.le.s32.totalorder 2, %s18
      // Predicated region
      $region57: #{tpu_custom_call.1} parent=5 // pred_check
        %p1670 = pneg %p1669
      $region58: #{tpu_custom_call.1} parent=5 // pred_check_branch
        %1672 = sbr.rel (%p1670) target = $region60
      $region59: #{tpu_custom_call.1} parent=5 // pred_region
        %s1673 = ssub.s32 %s18, 2
        // Predicated region
        $region61: #{tpu_custom_call.1} parent=59 // pred_check
          %p1674 = pneg %p157
        $region62: #{tpu_custom_call.1} parent=59 // pred_check_branch
          %1676 = sbr.rel (%p1674) target = $region64
        $region63: #{tpu_custom_call.1} parent=59 // pred_region
          %s1677 = sand.u32 %s142, 1
          %s1678 = scalar_lea.sflag [#allocation4], %s1677
          %s1679 = sand.u32 %s142, 1
          %s1680 = smul.addr %s1679, 128
          %s1681 = scalar_lea.vmem [#allocation8], %s1680
          %1682 = dma.done %s1678, 2048
        $region64: #{tpu_custom_call.1} parent=59 // pred_fallthru
          _
      $region60: #{tpu_custom_call.1} parent=5 // pred_fallthru
        _
    $region6: #{tpu_custom_call.1} parent=1 // loop_footer
      %s22 = sadd.s32 1, %s18
    $region7: #{tpu_custom_call.1} parent=1 // loop_footer_branch
      %17 = sbr.rel target = $region3
    $region8: #{tpu_custom_call.1} parent=1 // loop_exit
      _
    %1683 = vsyncpa [#allocation3], 1
    %s1684 = scalar_lea.sflag [#allocation3], 1
    %1685 = vsyncpa %s1684, 1
    %1686 = vsyncpa [#allocation6], 1
    %1687 = vsyncpa [#allocation4], 1
    %s1688 = scalar_lea.sflag [#allocation4], 1
    %1689 = vsyncpa %s1688, 1

</llo_original>
